<compile_context>
chip_gen: v5e
topology: v5e:2x2
jax: 0.10.0
libtpu: 0.0.40
codegen_flags: <defaults>
</compile_context>

<pallas_src>
import functools

import jax
import jax.numpy as jnp
from jax.experimental import pallas as pl
from jax.experimental.pallas import tpu as pltpu


def _round_up(x, m):
    return ((x + m - 1) // m) * m


def _cdiv(a, b):
    return (a + b - 1) // b


def _pick_tile_b(batch, tile_b_max=1024):
    """Rows per batch tile: multiple of 128, <= tile_b_max, and >= 2 grid steps
    whenever the batch is big enough so a v7x megacore can shard the batch axis."""
    b128 = _round_up(batch, 128)
    if b128 <= 128:
        return 128
    if b128 <= tile_b_max:
        return _round_up(_cdiv(batch, 2), 128)
    return tile_b_max


def _fused_mlp_kernel(*refs, n_layers, in_true):
    # refs = (x_ref, w1, b1, ..., wn, bn, o_ref, xpad_scr)
    x_ref = refs[0]
    wb = refs[1:1 + 2 * n_layers]
    o_ref = refs[1 + 2 * n_layers]
    xpad = refs[2 + 2 * n_layers]

    # Lane-pad the 12 real input columns to the 128-wide contraction inside VMEM.
    # Zeroing every step (cheap: ~tile_b*128 f32 of VPU stores) keeps the pad lanes
    # correct even when the "parallel" batch axis is sharded across TensorCores.
    xpad[...] = jnp.zeros_like(xpad)
    xpad[:, :in_true] = x_ref[...]

    h = xpad[...]                                  # (tile_b, 128) f32
    for i in range(n_layers):                      # static unroll: 6 MXU passes
        w = wb[2 * i][...]                         # (in_pad, out_pad)
        b = wb[2 * i + 1][...]                     # (1, out_pad) broadcast over rows
        h = jnp.dot(h, w, preferred_element_type=jnp.float32) + b
        if i != n_layers - 1:
            h = jnp.maximum(h, 0.0)

    # Final result is (tile_b, 128) with only column 0 real (padded weight columns
    # and biases are zero).  Pack it lane-dense: transpose via XLU, keep row 0.
    o_ref[...] = jnp.transpose(h)[0:1, :].astype(o_ref.dtype)


def fused_mlp_forward(x, padded_params, in_true, out_true, *, tile_b_max=1024):
    """x: (B, in_true) f32.  padded_params: list of (w_pad, b_pad).  Returns (B, 1)."""
    assert out_true == 1, "lane-packed output path assumes a single output feature"
    batch = x.shape[0]
    assert x.shape[1] == in_true
    n_layers = len(padded_params)
    in_pad = padded_params[0][0].shape[0]          # 128

    tile_b = _pick_tile_b(batch, tile_b_max)
    num_tiles = _cdiv(batch, tile_b)
    out_lanes = num_tiles * tile_b                 # lane-packed output width

    flat_params = [p for wb in padded_params for p in wb]
    kernel = functools.partial(_fused_mlp_kernel, n_layers=n_layers, in_true=in_true)

    # x: gridded over batch tiles, last block may be ragged (OOB rows hold garbage,
    # rows are independent, and only output lanes < batch are read back).
    in_specs = [pl.BlockSpec((tile_b, in_true), lambda i: (i, 0))]
    # Weights/biases: full blocks with constant index maps -> stay VMEM-resident.
    for (w, b) in padded_params:
        in_specs.append(pl.BlockSpec(w.shape, lambda i: (0, 0)))
        in_specs.append(pl.BlockSpec(b.shape, lambda i: (0, 0)))

    out = pl.pallas_call(
        kernel,
        out_shape=jax.ShapeDtypeStruct((1, out_lanes), jnp.float32),
        grid=(num_tiles,),
        in_specs=in_specs,
        out_specs=pl.BlockSpec((1, tile_b), lambda i: (0, i)),
        scratch_shapes=[pltpu.VMEM((tile_b, in_pad), jnp.float32)],
        compiler_params=pltpu.CompilerParams(
            dimension_semantics=("parallel",),
        ),
    )(x, *flat_params)

    # (1, num_tiles*tile_b) lane-packed -> (B, 1); ragged tail lanes are dropped.
    return out[0, :batch].reshape(batch, out_true)


class FeedForwardNNPallas:
    """JAX/Pallas re-implementation of the PyTorch FeedForwardNN forward pass."""

    def __init__(self, key, input_size=12, hidden_sizes=None, output_size=1):
        if hidden_sizes is None:
            hidden_sizes = [400, 200, 100, 50, 25]
        assert output_size == 1
        self.input_size = input_size
        self.hidden_sizes = hidden_sizes
        self.output_size = output_size

        dims = [input_size] + hidden_sizes + [output_size]

        # Unpadded params (PyTorch nn.Linear default init) — used by the reference.
        self.params = []
        for i in range(len(dims) - 1):
            fan_in, fan_out = dims[i], dims[i + 1]
            key, kw, kb = jax.random.split(key, 3)
            bound = 1.0 / (fan_in ** 0.5)
            w = jax.random.uniform(kw, (fan_in, fan_out), jnp.float32, -bound, bound)
            b = jax.random.uniform(kb, (1, fan_out), jnp.float32, -bound, bound)
            self.params.append((w, b))

        # Zero-padded (multiple-of-128) copies -> numerically exact (ReLU(0)=0 and
        # zero output columns propagate cleanly).  Input dim padded to 128 to match
        # the in-kernel VMEM scratch that lane-pads x.
        dims_pad = [_round_up(d, 128) for d in dims]
        self.padded_params = []
        for i, (w, b) in enumerate(self.params):
            in_p, out_p = dims_pad[i], dims_pad[i + 1]
            w_pad = jnp.zeros((in_p, out_p), jnp.float32).at[: w.shape[0], : w.shape[1]].set(w)
            b_pad = jnp.zeros((1, out_p), jnp.float32).at[:, : b.shape[1]].set(b)
            self.padded_params.append((w_pad, b_pad))

    def __call__(self, x):
        return fused_mlp_forward(
            x, self.padded_params, self.input_size, self.output_size
        )


def reference_forward(params, x):
    n_layers = len(params)
    for idx, (w, b) in enumerate(params):
        x = x @ w + b
        if idx != n_layers - 1:
            x = jnp.maximum(x, 0.0)
    return x


if __name__ == "__main__":
    key = jax.random.PRNGKey(0)
    key_model, key_x1, key_x2 = jax.random.split(key, 3)

    model = FeedForwardNNPallas(
        key_model, input_size=12, hidden_sizes=[400, 200, 100, 50, 25], output_size=1
    )

    # Small batch -> single (ragged) 128-row tile, one grid step.
    batch1 = 8
    x1 = jax.random.normal(key_x1, (batch1, 12), jnp.float32)
    out1 = jax.block_until_ready(model(x1))
    ref1 = reference_forward(model.params, x1)
    assert out1.shape == (batch1, 1), out1.shape
    assert jnp.allclose(out1, ref1, atol=1e-4, rtol=1e-4), (
        f"max abs err = {jnp.max(jnp.abs(out1 - ref1))}"
    )

    # Moderate batch -> two 256-row grid steps (v7x megacore) with a ragged last tile.
    batch2 = 300
    x2 = jax.random.normal(key_x2, (batch2, 12), jnp.float32)
    out2 = jax.block_until_ready(model(x2))
    ref2 = reference_forward(model.params, x2)
    assert out2.shape == (batch2, 1), out2.shape
    assert jnp.allclose(out2, ref2, atol=1e-4, rtol=1e-4), (
        f"max abs err = {jnp.max(jnp.abs(out2 - ref2))}"
    )

    print("KERNEL_OK")
</pallas_src>

<mosaic_0001>
module attributes {stable_mosaic.version = 11 : i64} {
  func.func @_fused_mlp_kernel(%arg0: i32, %arg1: memref<128x12xf32, #tpu.memory_space<vmem>>, %arg2: memref<128x512xf32, #tpu.memory_space<vmem>>, %arg3: memref<1x512xf32, #tpu.memory_space<vmem>>, %arg4: memref<512x256xf32, #tpu.memory_space<vmem>>, %arg5: memref<1x256xf32, #tpu.memory_space<vmem>>, %arg6: memref<256x128xf32, #tpu.memory_space<vmem>>, %arg7: memref<1x128xf32, #tpu.memory_space<vmem>>, %arg8: memref<128x128xf32, #tpu.memory_space<vmem>>, %arg9: memref<1x128xf32, #tpu.memory_space<vmem>>, %arg10: memref<128x128xf32, #tpu.memory_space<vmem>>, %arg11: memref<1x128xf32, #tpu.memory_space<vmem>>, %arg12: memref<128x128xf32, #tpu.memory_space<vmem>>, %arg13: memref<1x128xf32, #tpu.memory_space<vmem>>, %arg14: memref<1x128xf32, #tpu.memory_space<vmem>>, %arg15: memref<128x128xf32, #tpu.memory_space<vmem>>) attributes {dimension_semantics = [#tpu.dimension_semantics<parallel>], iteration_bounds = array<i64: 1>, scalar_prefetch = 0 : i64, scratch_operands = 1 : i64, tpu.core_type = #tpu.core_type<tc>, window_params = [{transform_indices = @transform_0, window_bounds = array<i64: 128, 12>}, {pipeline_mode = #tpu.pipeline_mode<synchronous>, transform_indices = @transform_1, window_bounds = array<i64: 128, 512>}, {pipeline_mode = #tpu.pipeline_mode<synchronous>, transform_indices = @transform_2, window_bounds = array<i64: 1, 512>}, {pipeline_mode = #tpu.pipeline_mode<synchronous>, transform_indices = @transform_3, window_bounds = array<i64: 512, 256>}, {pipeline_mode = #tpu.pipeline_mode<synchronous>, transform_indices = @transform_4, window_bounds = array<i64: 1, 256>}, {pipeline_mode = #tpu.pipeline_mode<synchronous>, transform_indices = @transform_5, window_bounds = array<i64: 256, 128>}, {pipeline_mode = #tpu.pipeline_mode<synchronous>, transform_indices = @transform_6, window_bounds = array<i64: 1, 128>}, {pipeline_mode = #tpu.pipeline_mode<synchronous>, transform_indices = @transform_7, window_bounds = array<i64: 128, 128>}, {pipeline_mode = #tpu.pipeline_mode<synchronous>, transform_indices = @transform_8, window_bounds = array<i64: 1, 128>}, {pipeline_mode = #tpu.pipeline_mode<synchronous>, transform_indices = @transform_9, window_bounds = array<i64: 128, 128>}, {pipeline_mode = #tpu.pipeline_mode<synchronous>, transform_indices = @transform_10, window_bounds = array<i64: 1, 128>}, {pipeline_mode = #tpu.pipeline_mode<synchronous>, transform_indices = @transform_11, window_bounds = array<i64: 128, 128>}, {pipeline_mode = #tpu.pipeline_mode<synchronous>, transform_indices = @transform_12, window_bounds = array<i64: 1, 128>}, {transform_indices = @transform_13, window_bounds = array<i64: 1, 128>}]} {
    %cst = arith.constant 0.000000e+00 : f32
    %0 = vector.broadcast %cst : f32 to vector<128x128xf32>
    %c0 = arith.constant 0 : index
    %c0_0 = arith.constant 0 : index
    %1 = vector.load %arg15[%c0, %c0_0] : memref<128x128xf32, #tpu.memory_space<vmem>>, vector<128x128xf32>
    tpu.vector_store %arg15[%c0, %c0_0], %0 {strides = array<i32>} : memref<128x128xf32, #tpu.memory_space<vmem>>, vector<128x128xf32>,
    %c0_1 = arith.constant 0 : index
    %c0_2 = arith.constant 0 : index
    %2 = vector.load %arg1[%c0_1, %c0_2] : memref<128x12xf32, #tpu.memory_space<vmem>>, vector<128x12xf32>
    %c0_3 = arith.constant 0 : index
    %c0_4 = arith.constant 0 : index
    %3 = vector.load %arg15[%c0_3, %c0_4] : memref<128x128xf32, #tpu.memory_space<vmem>>, vector<128x12xf32>
    tpu.vector_store %arg15[%c0_3, %c0_4], %2 {strides = array<i32>} : memref<128x128xf32, #tpu.memory_space<vmem>>, vector<128x12xf32>,
    %c0_5 = arith.constant 0 : index
    %c0_6 = arith.constant 0 : index
    %4 = vector.load %arg15[%c0_5, %c0_6] : memref<128x128xf32, #tpu.memory_space<vmem>>, vector<128x128xf32>
    %c0_7 = arith.constant 0 : index
    %c0_8 = arith.constant 0 : index
    %5 = vector.load %arg2[%c0_7, %c0_8] : memref<128x512xf32, #tpu.memory_space<vmem>>, vector<128x512xf32>
    %c0_9 = arith.constant 0 : index
    %c0_10 = arith.constant 0 : index
    %6 = vector.load %arg3[%c0_9, %c0_10] : memref<1x512xf32, #tpu.memory_space<vmem>>, vector<1x512xf32>
    %cst_11 = arith.constant dense<0.000000e+00> : vector<128x512xf32>
    %7 = tpu.matmul %4, %5, %cst_11 {dimension_numbers = #tpu.dot_dimension_numbers<[1], [0], [0], [1], [0, 0, 1, 1], [], []>} : vector<128x128xf32>, vector<128x512xf32>, vector<128x512xf32> -> vector<128x512xf32>
    %8 = vector.broadcast %6 : vector<1x512xf32> to vector<128x512xf32>
    %9 = arith.addf %7, %8 : vector<128x512xf32>
    %cst_12 = arith.constant 0.000000e+00 : f32
    %10 = vector.broadcast %cst_12 : f32 to vector<128x512xf32>
    %11 = arith.maximumf %9, %10 : vector<128x512xf32>
    %c0_13 = arith.constant 0 : index
    %c0_14 = arith.constant 0 : index
    %12 = vector.load %arg4[%c0_13, %c0_14] : memref<512x256xf32, #tpu.memory_space<vmem>>, vector<512x256xf32>
    %c0_15 = arith.constant 0 : index
    %c0_16 = arith.constant 0 : index
    %13 = vector.load %arg5[%c0_15, %c0_16] : memref<1x256xf32, #tpu.memory_space<vmem>>, vector<1x256xf32>
    %cst_17 = arith.constant dense<0.000000e+00> : vector<128x256xf32>
    %14 = tpu.matmul %11, %12, %cst_17 {dimension_numbers = #tpu.dot_dimension_numbers<[1], [0], [0], [1], [0, 0, 1, 1], [], []>} : vector<128x512xf32>, vector<512x256xf32>, vector<128x256xf32> -> vector<128x256xf32>
    %15 = vector.broadcast %13 : vector<1x256xf32> to vector<128x256xf32>
    %16 = arith.addf %14, %15 : vector<128x256xf32>
    %cst_18 = arith.constant 0.000000e+00 : f32
    %17 = vector.broadcast %cst_18 : f32 to vector<128x256xf32>
    %18 = arith.maximumf %16, %17 : vector<128x256xf32>
    %c0_19 = arith.constant 0 : index
    %c0_20 = arith.constant 0 : index
    %19 = vector.load %arg6[%c0_19, %c0_20] : memref<256x128xf32, #tpu.memory_space<vmem>>, vector<256x128xf32>
    %c0_21 = arith.constant 0 : index
    %c0_22 = arith.constant 0 : index
    %20 = vector.load %arg7[%c0_21, %c0_22] : memref<1x128xf32, #tpu.memory_space<vmem>>, vector<1x128xf32>
    %cst_23 = arith.constant dense<0.000000e+00> : vector<128x128xf32>
    %21 = tpu.matmul %18, %19, %cst_23 {dimension_numbers = #tpu.dot_dimension_numbers<[1], [0], [0], [1], [0, 0, 1, 1], [], []>} : vector<128x256xf32>, vector<256x128xf32>, vector<128x128xf32> -> vector<128x128xf32>
    %22 = vector.broadcast %20 : vector<1x128xf32> to vector<128x128xf32>
    %23 = arith.addf %21, %22 : vector<128x128xf32>
    %cst_24 = arith.constant 0.000000e+00 : f32
    %24 = vector.broadcast %cst_24 : f32 to vector<128x128xf32>
    %25 = arith.maximumf %23, %24 : vector<128x128xf32>
    %c0_25 = arith.constant 0 : index
    %c0_26 = arith.constant 0 : index
    %26 = vector.load %arg8[%c0_25, %c0_26] : memref<128x128xf32, #tpu.memory_space<vmem>>, vector<128x128xf32>
    %c0_27 = arith.constant 0 : index
    %c0_28 = arith.constant 0 : index
    %27 = vector.load %arg9[%c0_27, %c0_28] : memref<1x128xf32, #tpu.memory_space<vmem>>, vector<1x128xf32>
    %cst_29 = arith.constant dense<0.000000e+00> : vector<128x128xf32>
    %28 = tpu.matmul %25, %26, %cst_29 {dimension_numbers = #tpu.dot_dimension_numbers<[1], [0], [0], [1], [0, 0, 1, 1], [], []>} : vector<128x128xf32>, vector<128x128xf32>, vector<128x128xf32> -> vector<128x128xf32>
    %29 = vector.broadcast %27 : vector<1x128xf32> to vector<128x128xf32>
    %30 = arith.addf %28, %29 : vector<128x128xf32>
    %cst_30 = arith.constant 0.000000e+00 : f32
    %31 = vector.broadcast %cst_30 : f32 to vector<128x128xf32>
    %32 = arith.maximumf %30, %31 : vector<128x128xf32>
    %c0_31 = arith.constant 0 : index
    %c0_32 = arith.constant 0 : index
    %33 = vector.load %arg10[%c0_31, %c0_32] : memref<128x128xf32, #tpu.memory_space<vmem>>, vector<128x128xf32>
    %c0_33 = arith.constant 0 : index
    %c0_34 = arith.constant 0 : index
    %34 = vector.load %arg11[%c0_33, %c0_34] : memref<1x128xf32, #tpu.memory_space<vmem>>, vector<1x128xf32>
    %cst_35 = arith.constant dense<0.000000e+00> : vector<128x128xf32>
    %35 = tpu.matmul %32, %33, %cst_35 {dimension_numbers = #tpu.dot_dimension_numbers<[1], [0], [0], [1], [0, 0, 1, 1], [], []>} : vector<128x128xf32>, vector<128x128xf32>, vector<128x128xf32> -> vector<128x128xf32>
    %36 = vector.broadcast %34 : vector<1x128xf32> to vector<128x128xf32>
    %37 = arith.addf %35, %36 : vector<128x128xf32>
    %cst_36 = arith.constant 0.000000e+00 : f32
    %38 = vector.broadcast %cst_36 : f32 to vector<128x128xf32>
    %39 = arith.maximumf %37, %38 : vector<128x128xf32>
    %c0_37 = arith.constant 0 : index
    %c0_38 = arith.constant 0 : index
    %40 = vector.load %arg12[%c0_37, %c0_38] : memref<128x128xf32, #tpu.memory_space<vmem>>, vector<128x128xf32>
    %c0_39 = arith.constant 0 : index
    %c0_40 = arith.constant 0 : index
    %41 = vector.load %arg13[%c0_39, %c0_40] : memref<1x128xf32, #tpu.memory_space<vmem>>, vector<1x128xf32>
    %cst_41 = arith.constant dense<0.000000e+00> : vector<128x128xf32>
    %42 = tpu.matmul %39, %40, %cst_41 {dimension_numbers = #tpu.dot_dimension_numbers<[1], [0], [0], [1], [0, 0, 1, 1], [], []>} : vector<128x128xf32>, vector<128x128xf32>, vector<128x128xf32> -> vector<128x128xf32>
    %43 = vector.broadcast %41 : vector<1x128xf32> to vector<128x128xf32>
    %44 = arith.addf %42, %43 : vector<128x128xf32>
    %45 = tpu.transpose %44, [1, 0] : vector<128x128xf32> -> vector<128x128xf32>
    %46 = vector.extract_strided_slice %45 {offsets = [0, 0], sizes = [1, 128], strides = [1, 1]} : vector<128x128xf32> to vector<1x128xf32>
    %c0_42 = arith.constant 0 : index
    %c0_43 = arith.constant 0 : index
    %47 = vector.load %arg14[%c0_42, %c0_43] : memref<1x128xf32, #tpu.memory_space<vmem>>, vector<1x128xf32>
    tpu.vector_store %arg14[%c0_42, %c0_43], %46 {strides = array<i32>} : memref<1x128xf32, #tpu.memory_space<vmem>>, vector<1x128xf32>,
    return
  }
  func.func @transform_0(%arg0: i32) -> (i32, i32) {
    %c0_i32 = arith.constant 0 : i32
    %c0_i32_0 = arith.constant 0 : i32
    return %arg0, %c0_i32 : i32, i32
  }
  func.func @transform_1(%arg0: i32) -> (i32, i32) {
    %c0_i32 = arith.constant 0 : i32
    %c0_i32_0 = arith.constant 0 : i32
    %c0_i32_1 = arith.constant 0 : i32
    return %c0_i32, %c0_i32_0 : i32, i32
  }
  func.func @transform_2(%arg0: i32) -> (i32, i32) {
    %c0_i32 = arith.constant 0 : i32
    %c0_i32_0 = arith.constant 0 : i32
    %c0_i32_1 = arith.constant 0 : i32
    return %c0_i32, %c0_i32_0 : i32, i32
  }
  func.func @transform_3(%arg0: i32) -> (i32, i32) {
    %c0_i32 = arith.constant 0 : i32
    %c0_i32_0 = arith.constant 0 : i32
    %c0_i32_1 = arith.constant 0 : i32
    return %c0_i32, %c0_i32_0 : i32, i32
  }
  func.func @transform_4(%arg0: i32) -> (i32, i32) {
    %c0_i32 = arith.constant 0 : i32
    %c0_i32_0 = arith.constant 0 : i32
    %c0_i32_1 = arith.constant 0 : i32
    return %c0_i32, %c0_i32_0 : i32, i32
  }
  func.func @transform_5(%arg0: i32) -> (i32, i32) {
    %c0_i32 = arith.constant 0 : i32
    %c0_i32_0 = arith.constant 0 : i32
    %c0_i32_1 = arith.constant 0 : i32
    return %c0_i32, %c0_i32_0 : i32, i32
  }
  func.func @transform_6(%arg0: i32) -> (i32, i32) {
    %c0_i32 = arith.constant 0 : i32
    %c0_i32_0 = arith.constant 0 : i32
    %c0_i32_1 = arith.constant 0 : i32
    return %c0_i32, %c0_i32_0 : i32, i32
  }
  func.func @transform_7(%arg0: i32) -> (i32, i32) {
    %c0_i32 = arith.constant 0 : i32
    %c0_i32_0 = arith.constant 0 : i32
    %c0_i32_1 = arith.constant 0 : i32
    return %c0_i32, %c0_i32_0 : i32, i32
  }
  func.func @transform_8(%arg0: i32) -> (i32, i32) {
    %c0_i32 = arith.constant 0 : i32
    %c0_i32_0 = arith.constant 0 : i32
    %c0_i32_1 = arith.constant 0 : i32
    return %c0_i32, %c0_i32_0 : i32, i32
  }
  func.func @transform_9(%arg0: i32) -> (i32, i32) {
    %c0_i32 = arith.constant 0 : i32
    %c0_i32_0 = arith.constant 0 : i32
    %c0_i32_1 = arith.constant 0 : i32
    return %c0_i32, %c0_i32_0 : i32, i32
  }
  func.func @transform_10(%arg0: i32) -> (i32, i32) {
    %c0_i32 = arith.constant 0 : i32
    %c0_i32_0 = arith.constant 0 : i32
    %c0_i32_1 = arith.constant 0 : i32
    return %c0_i32, %c0_i32_0 : i32, i32
  }
  func.func @transform_11(%arg0: i32) -> (i32, i32) {
    %c0_i32 = arith.constant 0 : i32
    %c0_i32_0 = arith.constant 0 : i32
    %c0_i32_1 = arith.constant 0 : i32
    return %c0_i32, %c0_i32_0 : i32, i32
  }
  func.func @transform_12(%arg0: i32) -> (i32, i32) {
    %c0_i32 = arith.constant 0 : i32
    %c0_i32_0 = arith.constant 0 : i32
    %c0_i32_1 = arith.constant 0 : i32
    return %c0_i32, %c0_i32_0 : i32, i32
  }
  func.func @transform_13(%arg0: i32) -> (i32, i32) {
    %c0_i32 = arith.constant 0 : i32
    %c0_i32_0 = arith.constant 0 : i32
    return %c0_i32, %arg0 : i32, i32
  }
}

</mosaic_0001>

<llo_original>
// kernel: tpu_custom_call.1
$region0: #{tpu_custom_call.1}
  #allocation0 [shape = 'u32[]', space=smem, size = 0x4, offset = 0x4, fixed_abs, tag = 'smem constant byte address 0x4 - core index']
  #allocation1 [shape = 'u32[72,128]{1,0:T(1,128)}', space=vmem, size = 0x9000, scoped, tag = 'internal scratch']
  #allocation2 [shape = 'f32[128,128]{1,0:T(8,128)}', space=vmem, size = 0x10000, scoped, tag = 'scratch operand']
  %s0 = inlined_call_operand.hbm [shape: f32[8,12], index: 0, kind: input, shape index: {}]
  %s1 = inlined_call_operand.hbm [shape: f32[128,512], index: 1, kind: input, shape index: {}]
  %s2 = inlined_call_operand.hbm [shape: f32[1,512], index: 2, kind: input, shape index: {}]
  %s3 = inlined_call_operand.hbm [shape: f32[512,256], index: 3, kind: input, shape index: {}]
  %s4 = inlined_call_operand.vmem [shape: f32[1,256], index: 4, kind: input, shape index: {}]
  %s5 = inlined_call_operand.hbm [shape: f32[256,128], index: 5, kind: input, shape index: {}]
  %s6 = inlined_call_operand.vmem [shape: f32[1,128], index: 6, kind: input, shape index: {}]
  %s7 = inlined_call_operand.hbm [shape: f32[128,128], index: 7, kind: input, shape index: {}]
  %s8 = inlined_call_operand.vmem [shape: f32[1,128], index: 8, kind: input, shape index: {}]
  %s9 = inlined_call_operand.hbm [shape: f32[128,128], index: 9, kind: input, shape index: {}]
  %s10 = inlined_call_operand.vmem [shape: f32[1,128], index: 10, kind: input, shape index: {}]
  %s11 = inlined_call_operand.hbm [shape: f32[128,128], index: 11, kind: input, shape index: {}]
  %s12 = inlined_call_operand.vmem [shape: f32[1,128], index: 12, kind: input, shape index: {}]
  %s13 = inlined_call_operand.hbm [shape: f32[1,128], index: 13, kind: output, shape index: {}]
  %s14 = sld [smem:[#allocation0]]
  $region94: #{tpu_custom_call.1} parent=0
    _
  %s16 = ssub.s32 1, %s14
  %s17 = scalar_select 0, %s16, %s14
  $region1: #{tpu_custom_call.1} parent=0
    #allocation3 [shape = 'u8[65536]{0}', space=vmem, size = 0x10000, scoped, tag = 'input window, operand 0, single buffered']
    #allocation4 [shape = 's32[1]{0}', space=sflag, size = 0x4, scoped, tag = 'scoped memory for tpu_custom_call.1']
    #allocation5 [shape = 's32[1]{0}', space=sflag, size = 0x4, scoped, tag = 'scoped memory for tpu_custom_call.1']
    #allocation6 [shape = 'u8[262144]{0}', space=vmem, size = 0x40000, scoped, tag = 'input window, operand 1, single buffered']
    #allocation7 [shape = 's32[1]{0}', space=sflag, size = 0x4, scoped, tag = 'scoped memory for tpu_custom_call.1']
    #allocation8 [shape = 'u8[2048]{0}', space=vmem, size = 0x800, scoped, tag = 'input window, operand 2, single buffered']
    #allocation9 [shape = 'u8[524288]{0}', space=vmem, size = 0x80000, scoped, tag = 'input window, operand 3, single buffered']
    #allocation10 [shape = 's32[1]{0}', space=sflag, size = 0x4, scoped, tag = 'scoped memory for tpu_custom_call.1']
    #allocation11 [shape = 'u8[131072]{0}', space=vmem, size = 0x20000, scoped, tag = 'input window, operand 5, single buffered']
    #allocation12 [shape = 'u8[65536]{0}', space=vmem, size = 0x10000, scoped, tag = 'input window, operand 7, single buffered']
    #allocation13 [shape = 's32[1]{0}', space=sflag, size = 0x4, scoped, tag = 'scoped memory for tpu_custom_call.1']
    #allocation14 [shape = 'u8[65536]{0}', space=vmem, size = 0x10000, scoped, tag = 'input window, operand 9, single buffered']
    #allocation15 [shape = 'u8[65536]{0}', space=vmem, size = 0x10000, scoped, tag = 'input window, operand 11, single buffered']
    #allocation16 [shape = 's32[1]{0}', space=sflag, size = 0x4, scoped, tag = 'scoped memory for tpu_custom_call.1']
    #allocation17 [shape = 'u8[512]{0}', space=vmem, size = 0x400, scoped, tag = 'output window, operand 0, single buffered']
    %18 = vsyncpa [#allocation4], 0
    %19 = vsyncpa [#allocation7], 0
    %20 = vsyncpa [#allocation10], 0
    %21 = vsyncpa [#allocation13], 0
    %22 = vsyncpa [#allocation16], 0
    %23 = vsyncpa [#allocation5], 0
    // Predicated region
    $region2: #{tpu_custom_call.1} parent=1 // pred_check
      _
    $region3: #{tpu_custom_call.1} parent=1 // pred_check_branch
      %25 = sbr.rel (0) target = $region5
    $region4: #{tpu_custom_call.1} parent=1 // pred_region
      %27 = vsyncadd [#allocation4], 1920
      %s28 = sshll.u32 %s0, 4
      %s29 = int_to_ptr.hbm [resolvable:$true] %s28
      %s30 = sshll.u32 [#allocation3], 4
      %s31 = int_to_ptr.vmem [resolvable:$true] %s30
      %36 = dma.hbm_to_vmem [thread:$0]  %s29, 128, %s31, [#allocation4], 128, 128, 8
    $region5: #{tpu_custom_call.1} parent=1 // pred_fallthru
      _
    // Predicated region
    $region6: #{tpu_custom_call.1} parent=1 // pred_check
      _
    $region7: #{tpu_custom_call.1} parent=1 // pred_check_branch
      %38 = sbr.rel (0) target = $region9
    $region8: #{tpu_custom_call.1} parent=1 // pred_region
      %40 = vsyncadd [#allocation7], 0
      %s41 = sshll.u32 %s1, 4
      %s42 = int_to_ptr.hbm [resolvable:$true] %s41
      %s43 = sshll.u32 [#allocation6], 4
      %s44 = int_to_ptr.vmem [resolvable:$true] %s43
      %49 = dma.hbm_to_vmem [thread:$0]  %s42, 8192, %s44, [#allocation7], 512, 512, 32
    $region9: #{tpu_custom_call.1} parent=1 // pred_fallthru
      _
    // Predicated region
    $region10: #{tpu_custom_call.1} parent=1 // pred_check
      _
    $region11: #{tpu_custom_call.1} parent=1 // pred_check_branch
      %51 = sbr.rel (0) target = $region13
    $region12: #{tpu_custom_call.1} parent=1 // pred_region
      %53 = vsyncadd [#allocation7], 0
      %s55 = sshll.u32 %s2, 4
      %s56 = int_to_ptr.hbm [resolvable:$true] %s55
      %s57 = sshll.u32 [#allocation8], 4
      %s58 = int_to_ptr.vmem [resolvable:$true] %s57
      %60 = dma.hbm_to_vmem [thread:$0]  %s56, 64, %s58, [#allocation7]
    $region13: #{tpu_custom_call.1} parent=1 // pred_fallthru
      _
    // Predicated region
    $region14: #{tpu_custom_call.1} parent=1 // pred_check
      _
    $region15: #{tpu_custom_call.1} parent=1 // pred_check_branch
      %62 = sbr.rel (0) target = $region17
    $region16: #{tpu_custom_call.1} parent=1 // pred_region
      %64 = vsyncadd [#allocation10], 0
      %s65 = sshll.u32 %s3, 4
      %s66 = int_to_ptr.hbm [resolvable:$true] %s65
      %s67 = sshll.u32 [#allocation9], 4
      %s68 = int_to_ptr.vmem [resolvable:$true] %s67
      %73 = dma.hbm_to_vmem [thread:$0]  %s66, 16384, %s68, [#allocation10], 256, 256, 16
    $region17: #{tpu_custom_call.1} parent=1 // pred_fallthru
      _
    // Predicated region
    $region18: #{tpu_custom_call.1} parent=1 // pred_check
      _
    $region19: #{tpu_custom_call.1} parent=1 // pred_check_branch
      %75 = sbr.rel (0) target = $region21
    $region20: #{tpu_custom_call.1} parent=1 // pred_region
      _
    $region21: #{tpu_custom_call.1} parent=1 // pred_fallthru
      _
    // Predicated region
    $region22: #{tpu_custom_call.1} parent=1 // pred_check
      _
    $region23: #{tpu_custom_call.1} parent=1 // pred_check_branch
      %77 = sbr.rel (0) target = $region25
    $region24: #{tpu_custom_call.1} parent=1 // pred_region
      %79 = vsyncadd [#allocation10], 0
      %s80 = sshll.u32 %s5, 4
      %s81 = int_to_ptr.hbm [resolvable:$true] %s80
      %s82 = sshll.u32 [#allocation11], 4
      %s83 = int_to_ptr.vmem [resolvable:$true] %s82
      %88 = dma.hbm_to_vmem [thread:$0]  %s81, 4096, %s83, [#allocation10], 128, 128, 8
    $region25: #{tpu_custom_call.1} parent=1 // pred_fallthru
      _
    // Predicated region
    $region26: #{tpu_custom_call.1} parent=1 // pred_check
      _
    $region27: #{tpu_custom_call.1} parent=1 // pred_check_branch
      %90 = sbr.rel (0) target = $region29
    $region28: #{tpu_custom_call.1} parent=1 // pred_region
      _
    $region29: #{tpu_custom_call.1} parent=1 // pred_fallthru
      _
    // Predicated region
    $region30: #{tpu_custom_call.1} parent=1 // pred_check
      _
    $region31: #{tpu_custom_call.1} parent=1 // pred_check_branch
      %92 = sbr.rel (0) target = $region33
    $region32: #{tpu_custom_call.1} parent=1 // pred_region
      %94 = vsyncadd [#allocation13], 0
      %s95 = sshll.u32 %s7, 4
      %s96 = int_to_ptr.hbm [resolvable:$true] %s95
      %s97 = sshll.u32 [#allocation12], 4
      %s98 = int_to_ptr.vmem [resolvable:$true] %s97
      %103 = dma.hbm_to_vmem [thread:$0]  %s96, 2048, %s98, [#allocation13], 128, 128, 8
    $region33: #{tpu_custom_call.1} parent=1 // pred_fallthru
      _
    // Predicated region
    $region34: #{tpu_custom_call.1} parent=1 // pred_check
      _
    $region35: #{tpu_custom_call.1} parent=1 // pred_check_branch
      %105 = sbr.rel (0) target = $region37
    $region36: #{tpu_custom_call.1} parent=1 // pred_region
      _
    $region37: #{tpu_custom_call.1} parent=1 // pred_fallthru
      _
    // Predicated region
    $region38: #{tpu_custom_call.1} parent=1 // pred_check
      _
    $region39: #{tpu_custom_call.1} parent=1 // pred_check_branch
      %107 = sbr.rel (0) target = $region41
    $region40: #{tpu_custom_call.1} parent=1 // pred_region
      %109 = vsyncadd [#allocation13], 0
      %s110 = sshll.u32 %s9, 4
      %s111 = int_to_ptr.hbm [resolvable:$true] %s110
      %s112 = sshll.u32 [#allocation14], 4
      %s113 = int_to_ptr.vmem [resolvable:$true] %s112
      %118 = dma.hbm_to_vmem [thread:$0]  %s111, 2048, %s113, [#allocation13], 128, 128, 8
    $region41: #{tpu_custom_call.1} parent=1 // pred_fallthru
      _
    // Predicated region
    $region42: #{tpu_custom_call.1} parent=1 // pred_check
      _
    $region43: #{tpu_custom_call.1} parent=1 // pred_check_branch
      %120 = sbr.rel (0) target = $region45
    $region44: #{tpu_custom_call.1} parent=1 // pred_region
      _
    $region45: #{tpu_custom_call.1} parent=1 // pred_fallthru
      _
    // Predicated region
    $region46: #{tpu_custom_call.1} parent=1 // pred_check
      _
    $region47: #{tpu_custom_call.1} parent=1 // pred_check_branch
      %122 = sbr.rel (0) target = $region49
    $region48: #{tpu_custom_call.1} parent=1 // pred_region
      %124 = vsyncadd [#allocation16], 0
      %s125 = sshll.u32 %s11, 4
      %s126 = int_to_ptr.hbm [resolvable:$true] %s125
      %s127 = sshll.u32 [#allocation15], 4
      %s128 = int_to_ptr.vmem [resolvable:$true] %s127
      %133 = dma.hbm_to_vmem [thread:$0]  %s126, 2048, %s128, [#allocation16], 128, 128, 8
    $region49: #{tpu_custom_call.1} parent=1 // pred_fallthru
      _
    // Predicated region
    $region50: #{tpu_custom_call.1} parent=1 // pred_check
      _
    $region51: #{tpu_custom_call.1} parent=1 // pred_check_branch
      %135 = sbr.rel (0) target = $region53
    $region52: #{tpu_custom_call.1} parent=1 // pred_region
      _
    $region53: #{tpu_custom_call.1} parent=1 // pred_fallthru
      _
    // Predicated region
    $region54: #{tpu_custom_call.1} parent=1 // pred_check
      _
    $region55: #{tpu_custom_call.1} parent=1 // pred_check_branch
      %137 = sbr.rel (0) target = $region57
    $region56: #{tpu_custom_call.1} parent=1 // pred_region
      %139 = dma.done [#allocation4], 2048
    $region57: #{tpu_custom_call.1} parent=1 // pred_fallthru
      _
    // Predicated region
    $region58: #{tpu_custom_call.1} parent=1 // pred_check
      _
    $region59: #{tpu_custom_call.1} parent=1 // pred_check_branch
      %141 = sbr.rel (0) target = $region61
    $region60: #{tpu_custom_call.1} parent=1 // pred_region
      %143 = dma.done [#allocation7], 8192
    $region61: #{tpu_custom_call.1} parent=1 // pred_fallthru
      _
    // Predicated region
    $region62: #{tpu_custom_call.1} parent=1 // pred_check
      _
    $region63: #{tpu_custom_call.1} parent=1 // pred_check_branch
      %145 = sbr.rel (0) target = $region65
    $region64: #{tpu_custom_call.1} parent=1 // pred_region
      %147 = dma.done [#allocation7], 64
    $region65: #{tpu_custom_call.1} parent=1 // pred_fallthru
      _
    // Predicated region
    $region66: #{tpu_custom_call.1} parent=1 // pred_check
      _
    $region67: #{tpu_custom_call.1} parent=1 // pred_check_branch
      %149 = sbr.rel (0) target = $region69
    $region68: #{tpu_custom_call.1} parent=1 // pred_region
      %151 = dma.done [#allocation10], 16384
    $region69: #{tpu_custom_call.1} parent=1 // pred_fallthru
      _
    // Predicated region
    $region70: #{tpu_custom_call.1} parent=1 // pred_check
      _
    $region71: #{tpu_custom_call.1} parent=1 // pred_check_branch
      %153 = sbr.rel (0) target = $region73
    $region72: #{tpu_custom_call.1} parent=1 // pred_region
      %155 = dma.done [#allocation10], 4096
    $region73: #{tpu_custom_call.1} parent=1 // pred_fallthru
      _
    // Predicated region
    $region74: #{tpu_custom_call.1} parent=1 // pred_check
      _
    $region75: #{tpu_custom_call.1} parent=1 // pred_check_branch
      %157 = sbr.rel (0) target = $region77
    $region76: #{tpu_custom_call.1} parent=1 // pred_region
      %159 = dma.done [#allocation13], 2048
    $region77: #{tpu_custom_call.1} parent=1 // pred_fallthru
      _
    // Predicated region
    $region78: #{tpu_custom_call.1} parent=1 // pred_check
      _
    $region79: #{tpu_custom_call.1} parent=1 // pred_check_branch
      %161 = sbr.rel (0) target = $region81
    $region80: #{tpu_custom_call.1} parent=1 // pred_region
      %163 = dma.done [#allocation13], 2048
    $region81: #{tpu_custom_call.1} parent=1 // pred_fallthru
      _
    // Predicated region
    $region82: #{tpu_custom_call.1} parent=1 // pred_check
      _
    $region83: #{tpu_custom_call.1} parent=1 // pred_check_branch
      %165 = sbr.rel (0) target = $region85
    $region84: #{tpu_custom_call.1} parent=1 // pred_region
      %167 = dma.done [#allocation16], 2048
    $region85: #{tpu_custom_call.1} parent=1 // pred_fallthru
      _
    %168 = vst [vmem:[#allocation2] sm:$0xff] 0.0
    %169 = vst [vmem:[#allocation2 + $0x8] sm:$0xff] 0.0
    %170 = vst [vmem:[#allocation2 + $0x10] sm:$0xff] 0.0
    %171 = vst [vmem:[#allocation2 + $0x18] sm:$0xff] 0.0
    %172 = vst [vmem:[#allocation2 + $0x20] sm:$0xff] 0.0
    %173 = vst [vmem:[#allocation2 + $0x28] sm:$0xff] 0.0
    %174 = vst [vmem:[#allocation2 + $0x30] sm:$0xff] 0.0
    %175 = vst [vmem:[#allocation2 + $0x38] sm:$0xff] 0.0
    %176 = vst [vmem:[#allocation2 + $0x40] sm:$0xff] 0.0
    %177 = vst [vmem:[#allocation2 + $0x48] sm:$0xff] 0.0
    %178 = vst [vmem:[#allocation2 + $0x50] sm:$0xff] 0.0
    %179 = vst [vmem:[#allocation2 + $0x58] sm:$0xff] 0.0
    %180 = vst [vmem:[#allocation2 + $0x60] sm:$0xff] 0.0
    %181 = vst [vmem:[#allocation2 + $0x68] sm:$0xff] 0.0
    %182 = vst [vmem:[#allocation2 + $0x70] sm:$0xff] 0.0
    %183 = vst [vmem:[#allocation2 + $0x78] sm:$0xff] 0.0
    %v184 = vld [vmem:[#allocation3] sm:$0xff]
    %v185 = vld [vmem:[#allocation3 + $0x8] sm:$0xff]
    %v186 = vld [vmem:[#allocation3 + $0x10] sm:$0xff]
    %v187 = vld [vmem:[#allocation3 + $0x18] sm:$0xff]
    %v188 = vld [vmem:[#allocation3 + $0x20] sm:$0xff]
    %v189 = vld [vmem:[#allocation3 + $0x28] sm:$0xff]
    %v190 = vld [vmem:[#allocation3 + $0x30] sm:$0xff]
    %v191 = vld [vmem:[#allocation3 + $0x38] sm:$0xff]
    %v192 = vld [vmem:[#allocation3 + $0x40] sm:$0xff]
    %v193 = vld [vmem:[#allocation3 + $0x48] sm:$0xff]
    %v194 = vld [vmem:[#allocation3 + $0x50] sm:$0xff]
    %v195 = vld [vmem:[#allocation3 + $0x58] sm:$0xff]
    %v196 = vld [vmem:[#allocation3 + $0x60] sm:$0xff]
    %v197 = vld [vmem:[#allocation3 + $0x68] sm:$0xff]
    %v198 = vld [vmem:[#allocation3 + $0x70] sm:$0xff]
    %v199 = vld [vmem:[#allocation3 + $0x78] sm:$0xff]
    %vm200 = vcmask 97280
    %201 = vst.msk [vmem:[#allocation2] sm:$0xff] %vm200, %v184
    %202 = vst.msk [vmem:[#allocation2 + $0x8] sm:$0xff] %vm200, %v185
    %203 = vst.msk [vmem:[#allocation2 + $0x10] sm:$0xff] %vm200, %v186
    %204 = vst.msk [vmem:[#allocation2 + $0x18] sm:$0xff] %vm200, %v187
    %205 = vst.msk [vmem:[#allocation2 + $0x20] sm:$0xff] %vm200, %v188
    %206 = vst.msk [vmem:[#allocation2 + $0x28] sm:$0xff] %vm200, %v189
    %207 = vst.msk [vmem:[#allocation2 + $0x30] sm:$0xff] %vm200, %v190
    %208 = vst.msk [vmem:[#allocation2 + $0x38] sm:$0xff] %vm200, %v191
    %209 = vst.msk [vmem:[#allocation2 + $0x40] sm:$0xff] %vm200, %v192
    %210 = vst.msk [vmem:[#allocation2 + $0x48] sm:$0xff] %vm200, %v193
    %211 = vst.msk [vmem:[#allocation2 + $0x50] sm:$0xff] %vm200, %v194
    %212 = vst.msk [vmem:[#allocation2 + $0x58] sm:$0xff] %vm200, %v195
    %213 = vst.msk [vmem:[#allocation2 + $0x60] sm:$0xff] %vm200, %v196
    %214 = vst.msk [vmem:[#allocation2 + $0x68] sm:$0xff] %vm200, %v197
    %215 = vst.msk [vmem:[#allocation2 + $0x70] sm:$0xff] %vm200, %v198
    %216 = vst.msk [vmem:[#allocation2 + $0x78] sm:$0xff] %vm200, %v199
    %v217 = vld [vmem:[#allocation2] sm:$0xff]
    %v218 = vld [vmem:[#allocation2 + $0x8] sm:$0xff]
    %v219 = vld [vmem:[#allocation2 + $0x10] sm:$0xff]
    %v220 = vld [vmem:[#allocation2 + $0x18] sm:$0xff]
    %v221 = vld [vmem:[#allocation2 + $0x20] sm:$0xff]
    %v222 = vld [vmem:[#allocation2 + $0x28] sm:$0xff]
    %v223 = vld [vmem:[#allocation2 + $0x30] sm:$0xff]
    %v224 = vld [vmem:[#allocation2 + $0x38] sm:$0xff]
    %v225 = vld [vmem:[#allocation2 + $0x40] sm:$0xff]
    %v226 = vld [vmem:[#allocation2 + $0x48] sm:$0xff]
    %v227 = vld [vmem:[#allocation2 + $0x50] sm:$0xff]
    %v228 = vld [vmem:[#allocation2 + $0x58] sm:$0xff]
    %v229 = vld [vmem:[#allocation2 + $0x60] sm:$0xff]
    %v230 = vld [vmem:[#allocation2 + $0x68] sm:$0xff]
    %v231 = vld [vmem:[#allocation2 + $0x70] sm:$0xff]
    %v232 = vld [vmem:[#allocation2 + $0x78] sm:$0xff]
    %v233 = vld [vmem:[#allocation6] sm:$0xff]
    %v234 = vld [vmem:[#allocation6 + $0x8] sm:$0xff]
    %v235 = vld [vmem:[#allocation6 + $0x10] sm:$0xff]
    %v236 = vld [vmem:[#allocation6 + $0x18] sm:$0xff]
    %v237 = vld [vmem:[#allocation6 + $0x20] sm:$0xff]
    %v238 = vld [vmem:[#allocation6 + $0x28] sm:$0xff]
    %v239 = vld [vmem:[#allocation6 + $0x30] sm:$0xff]
    %v240 = vld [vmem:[#allocation6 + $0x38] sm:$0xff]
    %v241 = vld [vmem:[#allocation6 + $0x40] sm:$0xff]
    %v242 = vld [vmem:[#allocation6 + $0x48] sm:$0xff]
    %v243 = vld [vmem:[#allocation6 + $0x50] sm:$0xff]
    %v244 = vld [vmem:[#allocation6 + $0x58] sm:$0xff]
    %v245 = vld [vmem:[#allocation6 + $0x60] sm:$0xff]
    %v246 = vld [vmem:[#allocation6 + $0x68] sm:$0xff]
    %v247 = vld [vmem:[#allocation6 + $0x70] sm:$0xff]
    %v248 = vld [vmem:[#allocation6 + $0x78] sm:$0xff]
    %v249 = vld [vmem:[#allocation6 + $0x80] sm:$0xff]
    %v250 = vld [vmem:[#allocation6 + $0x88] sm:$0xff]
    %v251 = vld [vmem:[#allocation6 + $0x90] sm:$0xff]
    %v252 = vld [vmem:[#allocation6 + $0x98] sm:$0xff]
    %v253 = vld [vmem:[#allocation6 + $0xa0] sm:$0xff]
    %v254 = vld [vmem:[#allocation6 + $0xa8] sm:$0xff]
    %v255 = vld [vmem:[#allocation6 + $0xb0] sm:$0xff]
    %v256 = vld [vmem:[#allocation6 + $0xb8] sm:$0xff]
    %v257 = vld [vmem:[#allocation6 + $0xc0] sm:$0xff]
    %v258 = vld [vmem:[#allocation6 + $0xc8] sm:$0xff]
    %v259 = vld [vmem:[#allocation6 + $0xd0] sm:$0xff]
    %v260 = vld [vmem:[#allocation6 + $0xd8] sm:$0xff]
    %v261 = vld [vmem:[#allocation6 + $0xe0] sm:$0xff]
    %v262 = vld [vmem:[#allocation6 + $0xe8] sm:$0xff]
    %v263 = vld [vmem:[#allocation6 + $0xf0] sm:$0xff]
    %v264 = vld [vmem:[#allocation6 + $0xf8] sm:$0xff]
    %v265 = vld [vmem:[#allocation6 + $0x100] sm:$0xff]
    %v266 = vld [vmem:[#allocation6 + $0x108] sm:$0xff]
    %v267 = vld [vmem:[#allocation6 + $0x110] sm:$0xff]
    %v268 = vld [vmem:[#allocation6 + $0x118] sm:$0xff]
    %v269 = vld [vmem:[#allocation6 + $0x120] sm:$0xff]
    %v270 = vld [vmem:[#allocation6 + $0x128] sm:$0xff]
    %v271 = vld [vmem:[#allocation6 + $0x130] sm:$0xff]
    %v272 = vld [vmem:[#allocation6 + $0x138] sm:$0xff]
    %v273 = vld [vmem:[#allocation6 + $0x140] sm:$0xff]
    %v274 = vld [vmem:[#allocation6 + $0x148] sm:$0xff]
    %v275 = vld [vmem:[#allocation6 + $0x150] sm:$0xff]
    %v276 = vld [vmem:[#allocation6 + $0x158] sm:$0xff]
    %v277 = vld [vmem:[#allocation6 + $0x160] sm:$0xff]
    %v278 = vld [vmem:[#allocation6 + $0x168] sm:$0xff]
    %v279 = vld [vmem:[#allocation6 + $0x170] sm:$0xff]
    %v280 = vld [vmem:[#allocation6 + $0x178] sm:$0xff]
    %v281 = vld [vmem:[#allocation6 + $0x180] sm:$0xff]
    %v282 = vld [vmem:[#allocation6 + $0x188] sm:$0xff]
    %v283 = vld [vmem:[#allocation6 + $0x190] sm:$0xff]
    %v284 = vld [vmem:[#allocation6 + $0x198] sm:$0xff]
    %v285 = vld [vmem:[#allocation6 + $0x1a0] sm:$0xff]
    %v286 = vld [vmem:[#allocation6 + $0x1a8] sm:$0xff]
    %v287 = vld [vmem:[#allocation6 + $0x1b0] sm:$0xff]
    %v288 = vld [vmem:[#allocation6 + $0x1b8] sm:$0xff]
    %v289 = vld [vmem:[#allocation6 + $0x1c0] sm:$0xff]
    %v290 = vld [vmem:[#allocation6 + $0x1c8] sm:$0xff]
    %v291 = vld [vmem:[#allocation6 + $0x1d0] sm:$0xff]
    %v292 = vld [vmem:[#allocation6 + $0x1d8] sm:$0xff]
    %v293 = vld [vmem:[#allocation6 + $0x1e0] sm:$0xff]
    %v294 = vld [vmem:[#allocation6 + $0x1e8] sm:$0xff]
    %v295 = vld [vmem:[#allocation6 + $0x1f0] sm:$0xff]
    %v296 = vld [vmem:[#allocation6 + $0x1f8] sm:$0xff]
    %v297 = vld [vmem:[#allocation8] sm:$0xf]
    %v299 = vperm.slane %v297, 0
    %v300 = vperm.slane %v297, 1
    %v301 = vperm.slane %v297, 2
    %v302 = vperm.slane %v297, 3
    %307 = vmatpush.msra.mxu0 %v293
    %308 = vmatpush.msra.mxu0 %v289
    %309 = vmatpush.msra.mxu0 %v285
    %310 = vmatpush.msra.mxu0 %v281
    %311 = vmatpush.msra.mxu0 %v277
    %312 = vmatpush.msra.mxu0 %v273
    %313 = vmatpush.msra.mxu0 %v269
    %314 = vmatpush.msra.mxu0 %v265
    %315 = vmatpush.msra.mxu0 %v261
    %316 = vmatpush.msra.mxu0 %v257
    %317 = vmatpush.msra.mxu0 %v253
    %318 = vmatpush.msra.mxu0 %v249
    %319 = vmatpush.msra.mxu0 %v245
    %320 = vmatpush.msra.mxu0 %v241
    %321 = vmatpush.msra.mxu0 %v237
    %322 = vmatpush.msra.mxu0 %v233
    %323 = vmatmul.f32.gmra.mxu0 %v217
    %v324 = vpop.f32.mrf.mxu0
    %v325 = vadd.f32 %v299, %v324
    %326 = vmatmul.f32.gmra.mxu0 %v218
    %v327 = vpop.f32.mrf.mxu0
    %v328 = vadd.f32 %v299, %v327
    %329 = vmatmul.f32.gmra.mxu0 %v219
    %v330 = vpop.f32.mrf.mxu0
    %v331 = vadd.f32 %v299, %v330
    %332 = vmatmul.f32.gmra.mxu0 %v220
    %v333 = vpop.f32.mrf.mxu0
    %v334 = vadd.f32 %v299, %v333
    %335 = vmatmul.f32.gmra.mxu0 %v221
    %v336 = vpop.f32.mrf.mxu0
    %v337 = vadd.f32 %v299, %v336
    %338 = vmatmul.f32.gmra.mxu0 %v222
    %v339 = vpop.f32.mrf.mxu0
    %v340 = vadd.f32 %v299, %v339
    %341 = vmatmul.f32.gmra.mxu0 %v223
    %v342 = vpop.f32.mrf.mxu0
    %v343 = vadd.f32 %v299, %v342
    %344 = vmatmul.f32.gmra.mxu0 %v224
    %v345 = vpop.f32.mrf.mxu0
    %v346 = vadd.f32 %v299, %v345
    %347 = vmatmul.f32.gmra.mxu0 %v225
    %v348 = vpop.f32.mrf.mxu0
    %v349 = vadd.f32 %v299, %v348
    %350 = vmatmul.f32.gmra.mxu0 %v226
    %v351 = vpop.f32.mrf.mxu0
    %v352 = vadd.f32 %v299, %v351
    %353 = vmatmul.f32.gmra.mxu0 %v227
    %v354 = vpop.f32.mrf.mxu0
    %v355 = vadd.f32 %v299, %v354
    %356 = vmatmul.f32.gmra.mxu0 %v228
    %v357 = vpop.f32.mrf.mxu0
    %v358 = vadd.f32 %v299, %v357
    %359 = vmatmul.f32.gmra.mxu0 %v229
    %v360 = vpop.f32.mrf.mxu0
    %v361 = vadd.f32 %v299, %v360
    %362 = vmatmul.f32.gmra.mxu0 %v230
    %v363 = vpop.f32.mrf.mxu0
    %v364 = vadd.f32 %v299, %v363
    %365 = vmatmul.f32.gmra.mxu0 %v231
    %v366 = vpop.f32.mrf.mxu0
    %v367 = vadd.f32 %v299, %v366
    %368 = vmatmul.f32.gmra.mxu0 %v232
    %v369 = vpop.f32.mrf.mxu0
    %v370 = vadd.f32 %v299, %v369
    %371 = vdwg.mxu0
    %372 = vmatpush.msra.mxu0 %v294
    %373 = vmatpush.msra.mxu0 %v290
    %374 = vmatpush.msra.mxu0 %v286
    %375 = vmatpush.msra.mxu0 %v282
    %376 = vmatpush.msra.mxu0 %v278
    %377 = vmatpush.msra.mxu0 %v274
    %378 = vmatpush.msra.mxu0 %v270
    %379 = vmatpush.msra.mxu0 %v266
    %380 = vmatpush.msra.mxu0 %v262
    %381 = vmatpush.msra.mxu0 %v258
    %382 = vmatpush.msra.mxu0 %v254
    %383 = vmatpush.msra.mxu0 %v250
    %384 = vmatpush.msra.mxu0 %v246
    %385 = vmatpush.msra.mxu0 %v242
    %386 = vmatpush.msra.mxu0 %v238
    %387 = vmatpush.msra.mxu0 %v234
    %388 = vmatmul.f32.gmra.mxu0 %v217
    %v389 = vpop.f32.mrf.mxu0
    %v390 = vadd.f32 %v300, %v389
    %391 = vmatmul.f32.gmra.mxu0 %v218
    %v392 = vpop.f32.mrf.mxu0
    %v393 = vadd.f32 %v300, %v392
    %394 = vmatmul.f32.gmra.mxu0 %v219
    %v395 = vpop.f32.mrf.mxu0
    %v396 = vadd.f32 %v300, %v395
    %397 = vmatmul.f32.gmra.mxu0 %v220
    %v398 = vpop.f32.mrf.mxu0
    %v399 = vadd.f32 %v300, %v398
    %400 = vmatmul.f32.gmra.mxu0 %v221
    %v401 = vpop.f32.mrf.mxu0
    %v402 = vadd.f32 %v300, %v401
    %403 = vmatmul.f32.gmra.mxu0 %v222
    %v404 = vpop.f32.mrf.mxu0
    %v405 = vadd.f32 %v300, %v404
    %406 = vmatmul.f32.gmra.mxu0 %v223
    %v407 = vpop.f32.mrf.mxu0
    %v408 = vadd.f32 %v300, %v407
    %409 = vmatmul.f32.gmra.mxu0 %v224
    %v410 = vpop.f32.mrf.mxu0
    %v411 = vadd.f32 %v300, %v410
    %412 = vmatmul.f32.gmra.mxu0 %v225
    %v413 = vpop.f32.mrf.mxu0
    %v414 = vadd.f32 %v300, %v413
    %415 = vmatmul.f32.gmra.mxu0 %v226
    %v416 = vpop.f32.mrf.mxu0
    %v417 = vadd.f32 %v300, %v416
    %418 = vmatmul.f32.gmra.mxu0 %v227
    %v419 = vpop.f32.mrf.mxu0
    %v420 = vadd.f32 %v300, %v419
    %421 = vmatmul.f32.gmra.mxu0 %v228
    %v422 = vpop.f32.mrf.mxu0
    %v423 = vadd.f32 %v300, %v422
    %424 = vmatmul.f32.gmra.mxu0 %v229
    %v425 = vpop.f32.mrf.mxu0
    %v426 = vadd.f32 %v300, %v425
    %427 = vmatmul.f32.gmra.mxu0 %v230
    %v428 = vpop.f32.mrf.mxu0
    %v429 = vadd.f32 %v300, %v428
    %430 = vmatmul.f32.gmra.mxu0 %v231
    %v431 = vpop.f32.mrf.mxu0
    %v432 = vadd.f32 %v300, %v431
    %433 = vmatmul.f32.gmra.mxu0 %v232
    %v434 = vpop.f32.mrf.mxu0
    %v435 = vadd.f32 %v300, %v434
    %436 = vdwg.mxu0
    %437 = vmatpush.msra.mxu0 %v295
    %438 = vmatpush.msra.mxu0 %v291
    %439 = vmatpush.msra.mxu0 %v287
    %440 = vmatpush.msra.mxu0 %v283
    %441 = vmatpush.msra.mxu0 %v279
    %442 = vmatpush.msra.mxu0 %v275
    %443 = vmatpush.msra.mxu0 %v271
    %444 = vmatpush.msra.mxu0 %v267
    %445 = vmatpush.msra.mxu0 %v263
    %446 = vmatpush.msra.mxu0 %v259
    %447 = vmatpush.msra.mxu0 %v255
    %448 = vmatpush.msra.mxu0 %v251
    %449 = vmatpush.msra.mxu0 %v247
    %450 = vmatpush.msra.mxu0 %v243
    %451 = vmatpush.msra.mxu0 %v239
    %452 = vmatpush.msra.mxu0 %v235
    %453 = vmatmul.f32.gmra.mxu0 %v217
    %v454 = vpop.f32.mrf.mxu0
    %v455 = vadd.f32 %v301, %v454
    %456 = vmatmul.f32.gmra.mxu0 %v218
    %v457 = vpop.f32.mrf.mxu0
    %v458 = vadd.f32 %v301, %v457
    %459 = vmatmul.f32.gmra.mxu0 %v219
    %v460 = vpop.f32.mrf.mxu0
    %v461 = vadd.f32 %v301, %v460
    %462 = vmatmul.f32.gmra.mxu0 %v220
    %v463 = vpop.f32.mrf.mxu0
    %v464 = vadd.f32 %v301, %v463
    %465 = vmatmul.f32.gmra.mxu0 %v221
    %v466 = vpop.f32.mrf.mxu0
    %v467 = vadd.f32 %v301, %v466
    %468 = vmatmul.f32.gmra.mxu0 %v222
    %v469 = vpop.f32.mrf.mxu0
    %v470 = vadd.f32 %v301, %v469
    %471 = vmatmul.f32.gmra.mxu0 %v223
    %v472 = vpop.f32.mrf.mxu0
    %v473 = vadd.f32 %v301, %v472
    %474 = vmatmul.f32.gmra.mxu0 %v224
    %v475 = vpop.f32.mrf.mxu0
    %v476 = vadd.f32 %v301, %v475
    %477 = vmatmul.f32.gmra.mxu0 %v225
    %v478 = vpop.f32.mrf.mxu0
    %v479 = vadd.f32 %v301, %v478
    %480 = vmatmul.f32.gmra.mxu0 %v226
    %v481 = vpop.f32.mrf.mxu0
    %v482 = vadd.f32 %v301, %v481
    %483 = vmatmul.f32.gmra.mxu0 %v227
    %v484 = vpop.f32.mrf.mxu0
    %v485 = vadd.f32 %v301, %v484
    %486 = vmatmul.f32.gmra.mxu0 %v228
    %v487 = vpop.f32.mrf.mxu0
    %v488 = vadd.f32 %v301, %v487
    %489 = vmatmul.f32.gmra.mxu0 %v229
    %v490 = vpop.f32.mrf.mxu0
    %v491 = vadd.f32 %v301, %v490
    %492 = vmatmul.f32.gmra.mxu0 %v230
    %v493 = vpop.f32.mrf.mxu0
    %v494 = vadd.f32 %v301, %v493
    %495 = vmatmul.f32.gmra.mxu0 %v231
    %v496 = vpop.f32.mrf.mxu0
    %v497 = vadd.f32 %v301, %v496
    %498 = vmatmul.f32.gmra.mxu0 %v232
    %v499 = vpop.f32.mrf.mxu0
    %v500 = vadd.f32 %v301, %v499
    %501 = vdwg.mxu0
    %502 = vmatpush.msra.mxu0 %v296
    %503 = vmatpush.msra.mxu0 %v292
    %504 = vmatpush.msra.mxu0 %v288
    %505 = vmatpush.msra.mxu0 %v284
    %506 = vmatpush.msra.mxu0 %v280
    %507 = vmatpush.msra.mxu0 %v276
    %508 = vmatpush.msra.mxu0 %v272
    %509 = vmatpush.msra.mxu0 %v268
    %510 = vmatpush.msra.mxu0 %v264
    %511 = vmatpush.msra.mxu0 %v260
    %512 = vmatpush.msra.mxu0 %v256
    %513 = vmatpush.msra.mxu0 %v252
    %514 = vmatpush.msra.mxu0 %v248
    %515 = vmatpush.msra.mxu0 %v244
    %516 = vmatpush.msra.mxu0 %v240
    %517 = vmatpush.msra.mxu0 %v236
    %518 = vmatmul.f32.gmra.mxu0 %v217
    %v519 = vpop.f32.mrf.mxu0
    %v520 = vadd.f32 %v302, %v519
    %521 = vmatmul.f32.gmra.mxu0 %v218
    %v522 = vpop.f32.mrf.mxu0
    %v523 = vadd.f32 %v302, %v522
    %524 = vmatmul.f32.gmra.mxu0 %v219
    %v525 = vpop.f32.mrf.mxu0
    %v526 = vadd.f32 %v302, %v525
    %527 = vmatmul.f32.gmra.mxu0 %v220
    %v528 = vpop.f32.mrf.mxu0
    %v529 = vadd.f32 %v302, %v528
    %530 = vmatmul.f32.gmra.mxu0 %v221
    %v531 = vpop.f32.mrf.mxu0
    %v532 = vadd.f32 %v302, %v531
    %533 = vmatmul.f32.gmra.mxu0 %v222
    %v534 = vpop.f32.mrf.mxu0
    %v535 = vadd.f32 %v302, %v534
    %536 = vmatmul.f32.gmra.mxu0 %v223
    %v537 = vpop.f32.mrf.mxu0
    %v538 = vadd.f32 %v302, %v537
    %539 = vmatmul.f32.gmra.mxu0 %v224
    %v540 = vpop.f32.mrf.mxu0
    %v541 = vadd.f32 %v302, %v540
    %542 = vmatmul.f32.gmra.mxu0 %v225
    %v543 = vpop.f32.mrf.mxu0
    %v544 = vadd.f32 %v302, %v543
    %545 = vmatmul.f32.gmra.mxu0 %v226
    %v546 = vpop.f32.mrf.mxu0
    %v547 = vadd.f32 %v302, %v546
    %548 = vmatmul.f32.gmra.mxu0 %v227
    %v549 = vpop.f32.mrf.mxu0
    %v550 = vadd.f32 %v302, %v549
    %551 = vmatmul.f32.gmra.mxu0 %v228
    %v552 = vpop.f32.mrf.mxu0
    %v553 = vadd.f32 %v302, %v552
    %554 = vmatmul.f32.gmra.mxu0 %v229
    %v555 = vpop.f32.mrf.mxu0
    %v556 = vadd.f32 %v302, %v555
    %557 = vmatmul.f32.gmra.mxu0 %v230
    %v558 = vpop.f32.mrf.mxu0
    %v559 = vadd.f32 %v302, %v558
    %560 = vmatmul.f32.gmra.mxu0 %v231
    %v561 = vpop.f32.mrf.mxu0
    %v562 = vadd.f32 %v302, %v561
    %563 = vmatmul.f32.gmra.mxu0 %v232
    %v564 = vpop.f32.mrf.mxu0
    %v565 = vadd.f32 %v302, %v564
    %566 = vdwg.mxu0
    %v567 = vmax.f32 %v325, 0.0
    %v568 = vmax.f32 %v390, 0.0
    %v569 = vmax.f32 %v455, 0.0
    %v570 = vmax.f32 %v520, 0.0
    %v571 = vmax.f32 %v328, 0.0
    %v572 = vmax.f32 %v393, 0.0
    %v573 = vmax.f32 %v458, 0.0
    %v574 = vmax.f32 %v523, 0.0
    %v575 = vmax.f32 %v331, 0.0
    %v576 = vmax.f32 %v396, 0.0
    %v577 = vmax.f32 %v461, 0.0
    %v578 = vmax.f32 %v526, 0.0
    %v579 = vmax.f32 %v334, 0.0
    %v580 = vmax.f32 %v399, 0.0
    %v581 = vmax.f32 %v464, 0.0
    %v582 = vmax.f32 %v529, 0.0
    %v583 = vmax.f32 %v337, 0.0
    %v584 = vmax.f32 %v402, 0.0
    %v585 = vmax.f32 %v467, 0.0
    %v586 = vmax.f32 %v532, 0.0
    %v587 = vmax.f32 %v340, 0.0
    %v588 = vmax.f32 %v405, 0.0
    %v589 = vmax.f32 %v470, 0.0
    %v590 = vmax.f32 %v535, 0.0
    %v591 = vmax.f32 %v343, 0.0
    %v592 = vmax.f32 %v408, 0.0
    %v593 = vmax.f32 %v473, 0.0
    %v594 = vmax.f32 %v538, 0.0
    %v595 = vmax.f32 %v346, 0.0
    %v596 = vmax.f32 %v411, 0.0
    %v597 = vmax.f32 %v476, 0.0
    %v598 = vmax.f32 %v541, 0.0
    %v599 = vmax.f32 %v349, 0.0
    %v600 = vmax.f32 %v414, 0.0
    %v601 = vmax.f32 %v479, 0.0
    %v602 = vmax.f32 %v544, 0.0
    %v603 = vmax.f32 %v352, 0.0
    %v604 = vmax.f32 %v417, 0.0
    %v605 = vmax.f32 %v482, 0.0
    %v606 = vmax.f32 %v547, 0.0
    %v607 = vmax.f32 %v355, 0.0
    %v608 = vmax.f32 %v420, 0.0
    %v609 = vmax.f32 %v485, 0.0
    %v610 = vmax.f32 %v550, 0.0
    %v611 = vmax.f32 %v358, 0.0
    %v612 = vmax.f32 %v423, 0.0
    %v613 = vmax.f32 %v488, 0.0
    %v614 = vmax.f32 %v553, 0.0
    %v615 = vmax.f32 %v361, 0.0
    %v616 = vmax.f32 %v426, 0.0
    %v617 = vmax.f32 %v491, 0.0
    %v618 = vmax.f32 %v556, 0.0
    %v619 = vmax.f32 %v364, 0.0
    %v620 = vmax.f32 %v429, 0.0
    %v621 = vmax.f32 %v494, 0.0
    %v622 = vmax.f32 %v559, 0.0
    %v623 = vmax.f32 %v367, 0.0
    %v624 = vmax.f32 %v432, 0.0
    %v625 = vmax.f32 %v497, 0.0
    %v626 = vmax.f32 %v562, 0.0
    %v627 = vmax.f32 %v370, 0.0
    %v628 = vmax.f32 %v435, 0.0
    %v629 = vmax.f32 %v500, 0.0
    %v630 = vmax.f32 %v565, 0.0
    %v631 = vld [vmem:[#allocation9] sm:$0xff]
    %v632 = vld [vmem:[#allocation9 + $0x8] sm:$0xff]
    %v633 = vld [vmem:[#allocation9 + $0x10] sm:$0xff]
    %v634 = vld [vmem:[#allocation9 + $0x18] sm:$0xff]
    %v635 = vld [vmem:[#allocation9 + $0x20] sm:$0xff]
    %v636 = vld [vmem:[#allocation9 + $0x28] sm:$0xff]
    %v637 = vld [vmem:[#allocation9 + $0x30] sm:$0xff]
    %v638 = vld [vmem:[#allocation9 + $0x38] sm:$0xff]
    %v639 = vld [vmem:[#allocation9 + $0x40] sm:$0xff]
    %v640 = vld [vmem:[#allocation9 + $0x48] sm:$0xff]
    %v641 = vld [vmem:[#allocation9 + $0x50] sm:$0xff]
    %v642 = vld [vmem:[#allocation9 + $0x58] sm:$0xff]
    %v643 = vld [vmem:[#allocation9 + $0x60] sm:$0xff]
    %v644 = vld [vmem:[#allocation9 + $0x68] sm:$0xff]
    %v645 = vld [vmem:[#allocation9 + $0x70] sm:$0xff]
    %v646 = vld [vmem:[#allocation9 + $0x78] sm:$0xff]
    %v647 = vld [vmem:[#allocation9 + $0x80] sm:$0xff]
    %v648 = vld [vmem:[#allocation9 + $0x88] sm:$0xff]
    %v649 = vld [vmem:[#allocation9 + $0x90] sm:$0xff]
    %v650 = vld [vmem:[#allocation9 + $0x98] sm:$0xff]
    %v651 = vld [vmem:[#allocation9 + $0xa0] sm:$0xff]
    %v652 = vld [vmem:[#allocation9 + $0xa8] sm:$0xff]
    %v653 = vld [vmem:[#allocation9 + $0xb0] sm:$0xff]
    %v654 = vld [vmem:[#allocation9 + $0xb8] sm:$0xff]
    %v655 = vld [vmem:[#allocation9 + $0xc0] sm:$0xff]
    %v656 = vld [vmem:[#allocation9 + $0xc8] sm:$0xff]
    %v657 = vld [vmem:[#allocation9 + $0xd0] sm:$0xff]
    %v658 = vld [vmem:[#allocation9 + $0xd8] sm:$0xff]
    %v659 = vld [vmem:[#allocation9 + $0xe0] sm:$0xff]
    %v660 = vld [vmem:[#allocation9 + $0xe8] sm:$0xff]
    %v661 = vld [vmem:[#allocation9 + $0xf0] sm:$0xff]
    %v662 = vld [vmem:[#allocation9 + $0xf8] sm:$0xff]
    %v663 = vld [vmem:[#allocation9 + $0x100] sm:$0xff]
    %v664 = vld [vmem:[#allocation9 + $0x108] sm:$0xff]
    %v665 = vld [vmem:[#allocation9 + $0x110] sm:$0xff]
    %v666 = vld [vmem:[#allocation9 + $0x118] sm:$0xff]
    %v667 = vld [vmem:[#allocation9 + $0x120] sm:$0xff]
    %v668 = vld [vmem:[#allocation9 + $0x128] sm:$0xff]
    %v669 = vld [vmem:[#allocation9 + $0x130] sm:$0xff]
    %v670 = vld [vmem:[#allocation9 + $0x138] sm:$0xff]
    %v671 = vld [vmem:[#allocation9 + $0x140] sm:$0xff]
    %v672 = vld [vmem:[#allocation9 + $0x148] sm:$0xff]
    %v673 = vld [vmem:[#allocation9 + $0x150] sm:$0xff]
    %v674 = vld [vmem:[#allocation9 + $0x158] sm:$0xff]
    %v675 = vld [vmem:[#allocation9 + $0x160] sm:$0xff]
    %v676 = vld [vmem:[#allocation9 + $0x168] sm:$0xff]
    %v677 = vld [vmem:[#allocation9 + $0x170] sm:$0xff]
    %v678 = vld [vmem:[#allocation9 + $0x178] sm:$0xff]
    %v679 = vld [vmem:[#allocation9 + $0x180] sm:$0xff]
    %v680 = vld [vmem:[#allocation9 + $0x188] sm:$0xff]
    %v681 = vld [vmem:[#allocation9 + $0x190] sm:$0xff]
    %v682 = vld [vmem:[#allocation9 + $0x198] sm:$0xff]
    %v683 = vld [vmem:[#allocation9 + $0x1a0] sm:$0xff]
    %v684 = vld [vmem:[#allocation9 + $0x1a8] sm:$0xff]
    %v685 = vld [vmem:[#allocation9 + $0x1b0] sm:$0xff]
    %v686 = vld [vmem:[#allocation9 + $0x1b8] sm:$0xff]
    %v687 = vld [vmem:[#allocation9 + $0x1c0] sm:$0xff]
    %v688 = vld [vmem:[#allocation9 + $0x1c8] sm:$0xff]
    %v689 = vld [vmem:[#allocation9 + $0x1d0] sm:$0xff]
    %v690 = vld [vmem:[#allocation9 + $0x1d8] sm:$0xff]
    %v691 = vld [vmem:[#allocation9 + $0x1e0] sm:$0xff]
    %v692 = vld [vmem:[#allocation9 + $0x1e8] sm:$0xff]
    %v693 = vld [vmem:[#allocation9 + $0x1f0] sm:$0xff]
    %v694 = vld [vmem:[#allocation9 + $0x1f8] sm:$0xff]
    %v695 = vld [vmem:[#allocation9 + $0x200] sm:$0xff]
    %v696 = vld [vmem:[#allocation9 + $0x208] sm:$0xff]
    %v697 = vld [vmem:[#allocation9 + $0x210] sm:$0xff]
    %v698 = vld [vmem:[#allocation9 + $0x218] sm:$0xff]
    %v699 = vld [vmem:[#allocation9 + $0x220] sm:$0xff]
    %v700 = vld [vmem:[#allocation9 + $0x228] sm:$0xff]
    %v701 = vld [vmem:[#allocation9 + $0x230] sm:$0xff]
    %v702 = vld [vmem:[#allocation9 + $0x238] sm:$0xff]
    %v703 = vld [vmem:[#allocation9 + $0x240] sm:$0xff]
    %v704 = vld [vmem:[#allocation9 + $0x248] sm:$0xff]
    %v705 = vld [vmem:[#allocation9 + $0x250] sm:$0xff]
    %v706 = vld [vmem:[#allocation9 + $0x258] sm:$0xff]
    %v707 = vld [vmem:[#allocation9 + $0x260] sm:$0xff]
    %v708 = vld [vmem:[#allocation9 + $0x268] sm:$0xff]
    %v709 = vld [vmem:[#allocation9 + $0x270] sm:$0xff]
    %v710 = vld [vmem:[#allocation9 + $0x278] sm:$0xff]
    %v711 = vld [vmem:[#allocation9 + $0x280] sm:$0xff]
    %v712 = vld [vmem:[#allocation9 + $0x288] sm:$0xff]
    %v713 = vld [vmem:[#allocation9 + $0x290] sm:$0xff]
    %v714 = vld [vmem:[#allocation9 + $0x298] sm:$0xff]
    %v715 = vld [vmem:[#allocation9 + $0x2a0] sm:$0xff]
    %v716 = vld [vmem:[#allocation9 + $0x2a8] sm:$0xff]
    %v717 = vld [vmem:[#allocation9 + $0x2b0] sm:$0xff]
    %v718 = vld [vmem:[#allocation9 + $0x2b8] sm:$0xff]
    %v719 = vld [vmem:[#allocation9 + $0x2c0] sm:$0xff]
    %v720 = vld [vmem:[#allocation9 + $0x2c8] sm:$0xff]
    %v721 = vld [vmem:[#allocation9 + $0x2d0] sm:$0xff]
    %v722 = vld [vmem:[#allocation9 + $0x2d8] sm:$0xff]
    %v723 = vld [vmem:[#allocation9 + $0x2e0] sm:$0xff]
    %v724 = vld [vmem:[#allocation9 + $0x2e8] sm:$0xff]
    %v725 = vld [vmem:[#allocation9 + $0x2f0] sm:$0xff]
    %v726 = vld [vmem:[#allocation9 + $0x2f8] sm:$0xff]
    %v727 = vld [vmem:[#allocation9 + $0x300] sm:$0xff]
    %v728 = vld [vmem:[#allocation9 + $0x308] sm:$0xff]
    %v729 = vld [vmem:[#allocation9 + $0x310] sm:$0xff]
    %v730 = vld [vmem:[#allocation9 + $0x318] sm:$0xff]
    %v731 = vld [vmem:[#allocation9 + $0x320] sm:$0xff]
    %v732 = vld [vmem:[#allocation9 + $0x328] sm:$0xff]
    %v733 = vld [vmem:[#allocation9 + $0x330] sm:$0xff]
    %v734 = vld [vmem:[#allocation9 + $0x338] sm:$0xff]
    %v735 = vld [vmem:[#allocation9 + $0x340] sm:$0xff]
    %v736 = vld [vmem:[#allocation9 + $0x348] sm:$0xff]
    %v737 = vld [vmem:[#allocation9 + $0x350] sm:$0xff]
    %v738 = vld [vmem:[#allocation9 + $0x358] sm:$0xff]
    %v739 = vld [vmem:[#allocation9 + $0x360] sm:$0xff]
    %v740 = vld [vmem:[#allocation9 + $0x368] sm:$0xff]
    %v741 = vld [vmem:[#allocation9 + $0x370] sm:$0xff]
    %v742 = vld [vmem:[#allocation9 + $0x378] sm:$0xff]
    %v743 = vld [vmem:[#allocation9 + $0x380] sm:$0xff]
    %v744 = vld [vmem:[#allocation9 + $0x388] sm:$0xff]
    %v745 = vld [vmem:[#allocation9 + $0x390] sm:$0xff]
    %v746 = vld [vmem:[#allocation9 + $0x398] sm:$0xff]
    %v747 = vld [vmem:[#allocation9 + $0x3a0] sm:$0xff]
    %v748 = vld [vmem:[#allocation9 + $0x3a8] sm:$0xff]
    %v749 = vld [vmem:[#allocation9 + $0x3b0] sm:$0xff]
    %v750 = vld [vmem:[#allocation9 + $0x3b8] sm:$0xff]
    %v751 = vld [vmem:[#allocation9 + $0x3c0] sm:$0xff]
    %v752 = vld [vmem:[#allocation9 + $0x3c8] sm:$0xff]
    %v753 = vld [vmem:[#allocation9 + $0x3d0] sm:$0xff]
    %v754 = vld [vmem:[#allocation9 + $0x3d8] sm:$0xff]
    %v755 = vld [vmem:[#allocation9 + $0x3e0] sm:$0xff]
    %v756 = vld [vmem:[#allocation9 + $0x3e8] sm:$0xff]
    %v757 = vld [vmem:[#allocation9 + $0x3f0] sm:$0xff]
    %v758 = vld [vmem:[#allocation9 + $0x3f8] sm:$0xff]
    %v759 = vld [vmem:[%s4] sm:$0x3]
    %v761 = vperm.slane %v759, 0
    %v762 = vperm.slane %v759, 1
    %765 = vmatpush.msra.mxu0 %v661
    %766 = vmatpush.msra.mxu0 %v659
    %767 = vmatpush.msra.mxu0 %v657
    %768 = vmatpush.msra.mxu0 %v655
    %769 = vmatpush.msra.mxu0 %v653
    %770 = vmatpush.msra.mxu0 %v651
    %771 = vmatpush.msra.mxu0 %v649
    %772 = vmatpush.msra.mxu0 %v647
    %773 = vmatpush.msra.mxu0 %v645
    %774 = vmatpush.msra.mxu0 %v643
    %775 = vmatpush.msra.mxu0 %v641
    %776 = vmatpush.msra.mxu0 %v639
    %777 = vmatpush.msra.mxu0 %v637
    %778 = vmatpush.msra.mxu0 %v635
    %779 = vmatpush.msra.mxu0 %v633
    %780 = vmatpush.msra.mxu0 %v631
    %781 = vmatmul.f32.gmra.mxu0 %v567
    %v782 = vpop.f32.mrf.mxu0
    %v783 = vadd.f32 %v761, %v782
    %784 = vmatmul.f32.gmra.mxu0 %v571
    %v785 = vpop.f32.mrf.mxu0
    %v786 = vadd.f32 %v761, %v785
    %787 = vmatmul.f32.gmra.mxu0 %v575
    %v788 = vpop.f32.mrf.mxu0
    %v789 = vadd.f32 %v761, %v788
    %790 = vmatmul.f32.gmra.mxu0 %v579
    %v791 = vpop.f32.mrf.mxu0
    %v792 = vadd.f32 %v761, %v791
    %793 = vmatmul.f32.gmra.mxu0 %v583
    %v794 = vpop.f32.mrf.mxu0
    %v795 = vadd.f32 %v761, %v794
    %796 = vmatmul.f32.gmra.mxu0 %v587
    %v797 = vpop.f32.mrf.mxu0
    %v798 = vadd.f32 %v761, %v797
    %799 = vmatmul.f32.gmra.mxu0 %v591
    %v800 = vpop.f32.mrf.mxu0
    %v801 = vadd.f32 %v761, %v800
    %802 = vmatmul.f32.gmra.mxu0 %v595
    %v803 = vpop.f32.mrf.mxu0
    %v804 = vadd.f32 %v761, %v803
    %805 = vmatmul.f32.gmra.mxu0 %v599
    %v806 = vpop.f32.mrf.mxu0
    %v807 = vadd.f32 %v761, %v806
    %808 = vmatmul.f32.gmra.mxu0 %v603
    %v809 = vpop.f32.mrf.mxu0
    %v810 = vadd.f32 %v761, %v809
    %811 = vmatmul.f32.gmra.mxu0 %v607
    %v812 = vpop.f32.mrf.mxu0
    %v813 = vadd.f32 %v761, %v812
    %814 = vmatmul.f32.gmra.mxu0 %v611
    %v815 = vpop.f32.mrf.mxu0
    %v816 = vadd.f32 %v761, %v815
    %817 = vmatmul.f32.gmra.mxu0 %v615
    %v818 = vpop.f32.mrf.mxu0
    %v819 = vadd.f32 %v761, %v818
    %820 = vmatmul.f32.gmra.mxu0 %v619
    %v821 = vpop.f32.mrf.mxu0
    %v822 = vadd.f32 %v761, %v821
    %823 = vmatmul.f32.gmra.mxu0 %v623
    %v824 = vpop.f32.mrf.mxu0
    %v825 = vadd.f32 %v761, %v824
    %826 = vmatmul.f32.gmra.mxu0 %v627
    %v827 = vpop.f32.mrf.mxu0
    %v828 = vadd.f32 %v761, %v827
    %829 = vdwg.mxu0
    %830 = vmatpush.msra.mxu0 %v693
    %831 = vmatpush.msra.mxu0 %v691
    %832 = vmatpush.msra.mxu0 %v689
    %833 = vmatpush.msra.mxu0 %v687
    %834 = vmatpush.msra.mxu0 %v685
    %835 = vmatpush.msra.mxu0 %v683
    %836 = vmatpush.msra.mxu0 %v681
    %837 = vmatpush.msra.mxu0 %v679
    %838 = vmatpush.msra.mxu0 %v677
    %839 = vmatpush.msra.mxu0 %v675
    %840 = vmatpush.msra.mxu0 %v673
    %841 = vmatpush.msra.mxu0 %v671
    %842 = vmatpush.msra.mxu0 %v669
    %843 = vmatpush.msra.mxu0 %v667
    %844 = vmatpush.msra.mxu0 %v665
    %845 = vmatpush.msra.mxu0 %v663
    %846 = vmatmul.f32.gmra.mxu0 %v568
    %v847 = vpop.f32.mrf.mxu0
    %v848 = vadd.f32 %v783, %v847
    %849 = vmatmul.f32.gmra.mxu0 %v572
    %v850 = vpop.f32.mrf.mxu0
    %v851 = vadd.f32 %v786, %v850
    %852 = vmatmul.f32.gmra.mxu0 %v576
    %v853 = vpop.f32.mrf.mxu0
    %v854 = vadd.f32 %v789, %v853
    %855 = vmatmul.f32.gmra.mxu0 %v580
    %v856 = vpop.f32.mrf.mxu0
    %v857 = vadd.f32 %v792, %v856
    %858 = vmatmul.f32.gmra.mxu0 %v584
    %v859 = vpop.f32.mrf.mxu0
    %v860 = vadd.f32 %v795, %v859
    %861 = vmatmul.f32.gmra.mxu0 %v588
    %v862 = vpop.f32.mrf.mxu0
    %v863 = vadd.f32 %v798, %v862
    %864 = vmatmul.f32.gmra.mxu0 %v592
    %v865 = vpop.f32.mrf.mxu0
    %v866 = vadd.f32 %v801, %v865
    %867 = vmatmul.f32.gmra.mxu0 %v596
    %v868 = vpop.f32.mrf.mxu0
    %v869 = vadd.f32 %v804, %v868
    %870 = vmatmul.f32.gmra.mxu0 %v600
    %v871 = vpop.f32.mrf.mxu0
    %v872 = vadd.f32 %v807, %v871
    %873 = vmatmul.f32.gmra.mxu0 %v604
    %v874 = vpop.f32.mrf.mxu0
    %v875 = vadd.f32 %v810, %v874
    %876 = vmatmul.f32.gmra.mxu0 %v608
    %v877 = vpop.f32.mrf.mxu0
    %v878 = vadd.f32 %v813, %v877
    %879 = vmatmul.f32.gmra.mxu0 %v612
    %v880 = vpop.f32.mrf.mxu0
    %v881 = vadd.f32 %v816, %v880
    %882 = vmatmul.f32.gmra.mxu0 %v616
    %v883 = vpop.f32.mrf.mxu0
    %v884 = vadd.f32 %v819, %v883
    %885 = vmatmul.f32.gmra.mxu0 %v620
    %v886 = vpop.f32.mrf.mxu0
    %v887 = vadd.f32 %v822, %v886
    %888 = vmatmul.f32.gmra.mxu0 %v624
    %v889 = vpop.f32.mrf.mxu0
    %v890 = vadd.f32 %v825, %v889
    %891 = vmatmul.f32.gmra.mxu0 %v628
    %v892 = vpop.f32.mrf.mxu0
    %v893 = vadd.f32 %v828, %v892
    %894 = vdwg.mxu0
    %895 = vmatpush.msra.mxu0 %v725
    %896 = vmatpush.msra.mxu0 %v723
    %897 = vmatpush.msra.mxu0 %v721
    %898 = vmatpush.msra.mxu0 %v719
    %899 = vmatpush.msra.mxu0 %v717
    %900 = vmatpush.msra.mxu0 %v715
    %901 = vmatpush.msra.mxu0 %v713
    %902 = vmatpush.msra.mxu0 %v711
    %903 = vmatpush.msra.mxu0 %v709
    %904 = vmatpush.msra.mxu0 %v707
    %905 = vmatpush.msra.mxu0 %v705
    %906 = vmatpush.msra.mxu0 %v703
    %907 = vmatpush.msra.mxu0 %v701
    %908 = vmatpush.msra.mxu0 %v699
    %909 = vmatpush.msra.mxu0 %v697
    %910 = vmatpush.msra.mxu0 %v695
    %911 = vmatmul.f32.gmra.mxu0 %v569
    %v912 = vpop.f32.mrf.mxu0
    %v913 = vadd.f32 %v848, %v912
    %914 = vmatmul.f32.gmra.mxu0 %v573
    %v915 = vpop.f32.mrf.mxu0
    %v916 = vadd.f32 %v851, %v915
    %917 = vmatmul.f32.gmra.mxu0 %v577
    %v918 = vpop.f32.mrf.mxu0
    %v919 = vadd.f32 %v854, %v918
    %920 = vmatmul.f32.gmra.mxu0 %v581
    %v921 = vpop.f32.mrf.mxu0
    %v922 = vadd.f32 %v857, %v921
    %923 = vmatmul.f32.gmra.mxu0 %v585
    %v924 = vpop.f32.mrf.mxu0
    %v925 = vadd.f32 %v860, %v924
    %926 = vmatmul.f32.gmra.mxu0 %v589
    %v927 = vpop.f32.mrf.mxu0
    %v928 = vadd.f32 %v863, %v927
    %929 = vmatmul.f32.gmra.mxu0 %v593
    %v930 = vpop.f32.mrf.mxu0
    %v931 = vadd.f32 %v866, %v930
    %932 = vmatmul.f32.gmra.mxu0 %v597
    %v933 = vpop.f32.mrf.mxu0
    %v934 = vadd.f32 %v869, %v933
    %935 = vmatmul.f32.gmra.mxu0 %v601
    %v936 = vpop.f32.mrf.mxu0
    %v937 = vadd.f32 %v872, %v936
    %938 = vmatmul.f32.gmra.mxu0 %v605
    %v939 = vpop.f32.mrf.mxu0
    %v940 = vadd.f32 %v875, %v939
    %941 = vmatmul.f32.gmra.mxu0 %v609
    %v942 = vpop.f32.mrf.mxu0
    %v943 = vadd.f32 %v878, %v942
    %944 = vmatmul.f32.gmra.mxu0 %v613
    %v945 = vpop.f32.mrf.mxu0
    %v946 = vadd.f32 %v881, %v945
    %947 = vmatmul.f32.gmra.mxu0 %v617
    %v948 = vpop.f32.mrf.mxu0
    %v949 = vadd.f32 %v884, %v948
    %950 = vmatmul.f32.gmra.mxu0 %v621
    %v951 = vpop.f32.mrf.mxu0
    %v952 = vadd.f32 %v887, %v951
    %953 = vmatmul.f32.gmra.mxu0 %v625
    %v954 = vpop.f32.mrf.mxu0
    %v955 = vadd.f32 %v890, %v954
    %956 = vmatmul.f32.gmra.mxu0 %v629
    %v957 = vpop.f32.mrf.mxu0
    %v958 = vadd.f32 %v893, %v957
    %959 = vdwg.mxu0
    %960 = vmatpush.msra.mxu0 %v757
    %961 = vmatpush.msra.mxu0 %v755
    %962 = vmatpush.msra.mxu0 %v753
    %963 = vmatpush.msra.mxu0 %v751
    %964 = vmatpush.msra.mxu0 %v749
    %965 = vmatpush.msra.mxu0 %v747
    %966 = vmatpush.msra.mxu0 %v745
    %967 = vmatpush.msra.mxu0 %v743
    %968 = vmatpush.msra.mxu0 %v741
    %969 = vmatpush.msra.mxu0 %v739
    %970 = vmatpush.msra.mxu0 %v737
    %971 = vmatpush.msra.mxu0 %v735
    %972 = vmatpush.msra.mxu0 %v733
    %973 = vmatpush.msra.mxu0 %v731
    %974 = vmatpush.msra.mxu0 %v729
    %975 = vmatpush.msra.mxu0 %v727
    %976 = vmatmul.f32.gmra.mxu0 %v570
    %v977 = vpop.f32.mrf.mxu0
    %v978 = vadd.f32 %v913, %v977
    %979 = vmatmul.f32.gmra.mxu0 %v574
    %v980 = vpop.f32.mrf.mxu0
    %v981 = vadd.f32 %v916, %v980
    %982 = vmatmul.f32.gmra.mxu0 %v578
    %v983 = vpop.f32.mrf.mxu0
    %v984 = vadd.f32 %v919, %v983
    %985 = vmatmul.f32.gmra.mxu0 %v582
    %v986 = vpop.f32.mrf.mxu0
    %v987 = vadd.f32 %v922, %v986
    %988 = vmatmul.f32.gmra.mxu0 %v586
    %v989 = vpop.f32.mrf.mxu0
    %v990 = vadd.f32 %v925, %v989
    %991 = vmatmul.f32.gmra.mxu0 %v590
    %v992 = vpop.f32.mrf.mxu0
    %v993 = vadd.f32 %v928, %v992
    %994 = vmatmul.f32.gmra.mxu0 %v594
    %v995 = vpop.f32.mrf.mxu0
    %v996 = vadd.f32 %v931, %v995
    %997 = vmatmul.f32.gmra.mxu0 %v598
    %v998 = vpop.f32.mrf.mxu0
    %v999 = vadd.f32 %v934, %v998
    %1000 = vmatmul.f32.gmra.mxu0 %v602
    %v1001 = vpop.f32.mrf.mxu0
    %v1002 = vadd.f32 %v937, %v1001
    %1003 = vmatmul.f32.gmra.mxu0 %v606
    %v1004 = vpop.f32.mrf.mxu0
    %v1005 = vadd.f32 %v940, %v1004
    %1006 = vmatmul.f32.gmra.mxu0 %v610
    %v1007 = vpop.f32.mrf.mxu0
    %v1008 = vadd.f32 %v943, %v1007
    %1009 = vmatmul.f32.gmra.mxu0 %v614
    %v1010 = vpop.f32.mrf.mxu0
    %v1011 = vadd.f32 %v946, %v1010
    %1012 = vmatmul.f32.gmra.mxu0 %v618
    %v1013 = vpop.f32.mrf.mxu0
    %v1014 = vadd.f32 %v949, %v1013
    %1015 = vmatmul.f32.gmra.mxu0 %v622
    %v1016 = vpop.f32.mrf.mxu0
    %v1017 = vadd.f32 %v952, %v1016
    %1018 = vmatmul.f32.gmra.mxu0 %v626
    %v1019 = vpop.f32.mrf.mxu0
    %v1020 = vadd.f32 %v955, %v1019
    %1021 = vmatmul.f32.gmra.mxu0 %v630
    %v1022 = vpop.f32.mrf.mxu0
    %v1023 = vadd.f32 %v958, %v1022
    %1024 = vdwg.mxu0
    %1025 = vmatpush.msra.mxu0 %v662
    %1026 = vmatpush.msra.mxu0 %v660
    %1027 = vmatpush.msra.mxu0 %v658
    %1028 = vmatpush.msra.mxu0 %v656
    %1029 = vmatpush.msra.mxu0 %v654
    %1030 = vmatpush.msra.mxu0 %v652
    %1031 = vmatpush.msra.mxu0 %v650
    %1032 = vmatpush.msra.mxu0 %v648
    %1033 = vmatpush.msra.mxu0 %v646
    %1034 = vmatpush.msra.mxu0 %v644
    %1035 = vmatpush.msra.mxu0 %v642
    %1036 = vmatpush.msra.mxu0 %v640
    %1037 = vmatpush.msra.mxu0 %v638
    %1038 = vmatpush.msra.mxu0 %v636
    %1039 = vmatpush.msra.mxu0 %v634
    %1040 = vmatpush.msra.mxu0 %v632
    %1041 = vmatmul.f32.gmra.mxu0 %v567
    %v1042 = vpop.f32.mrf.mxu0
    %v1043 = vadd.f32 %v762, %v1042
    %1044 = vmatmul.f32.gmra.mxu0 %v571
    %v1045 = vpop.f32.mrf.mxu0
    %v1046 = vadd.f32 %v762, %v1045
    %1047 = vmatmul.f32.gmra.mxu0 %v575
    %v1048 = vpop.f32.mrf.mxu0
    %v1049 = vadd.f32 %v762, %v1048
    %1050 = vmatmul.f32.gmra.mxu0 %v579
    %v1051 = vpop.f32.mrf.mxu0
    %v1052 = vadd.f32 %v762, %v1051
    %1053 = vmatmul.f32.gmra.mxu0 %v583
    %v1054 = vpop.f32.mrf.mxu0
    %v1055 = vadd.f32 %v762, %v1054
    %1056 = vmatmul.f32.gmra.mxu0 %v587
    %v1057 = vpop.f32.mrf.mxu0
    %v1058 = vadd.f32 %v762, %v1057
    %1059 = vmatmul.f32.gmra.mxu0 %v591
    %v1060 = vpop.f32.mrf.mxu0
    %v1061 = vadd.f32 %v762, %v1060
    %1062 = vmatmul.f32.gmra.mxu0 %v595
    %v1063 = vpop.f32.mrf.mxu0
    %v1064 = vadd.f32 %v762, %v1063
    %1065 = vmatmul.f32.gmra.mxu0 %v599
    %v1066 = vpop.f32.mrf.mxu0
    %v1067 = vadd.f32 %v762, %v1066
    %1068 = vmatmul.f32.gmra.mxu0 %v603
    %v1069 = vpop.f32.mrf.mxu0
    %v1070 = vadd.f32 %v762, %v1069
    %1071 = vmatmul.f32.gmra.mxu0 %v607
    %v1072 = vpop.f32.mrf.mxu0
    %v1073 = vadd.f32 %v762, %v1072
    %1074 = vmatmul.f32.gmra.mxu0 %v611
    %v1075 = vpop.f32.mrf.mxu0
    %v1076 = vadd.f32 %v762, %v1075
    %1077 = vmatmul.f32.gmra.mxu0 %v615
    %v1078 = vpop.f32.mrf.mxu0
    %v1079 = vadd.f32 %v762, %v1078
    %1080 = vmatmul.f32.gmra.mxu0 %v619
    %v1081 = vpop.f32.mrf.mxu0
    %v1082 = vadd.f32 %v762, %v1081
    %1083 = vmatmul.f32.gmra.mxu0 %v623
    %v1084 = vpop.f32.mrf.mxu0
    %v1085 = vadd.f32 %v762, %v1084
    %1086 = vmatmul.f32.gmra.mxu0 %v627
    %v1087 = vpop.f32.mrf.mxu0
    %v1088 = vadd.f32 %v762, %v1087
    %1089 = vdwg.mxu0
    %1090 = vmatpush.msra.mxu0 %v694
    %1091 = vmatpush.msra.mxu0 %v692
    %1092 = vmatpush.msra.mxu0 %v690
    %1093 = vmatpush.msra.mxu0 %v688
    %1094 = vmatpush.msra.mxu0 %v686
    %1095 = vmatpush.msra.mxu0 %v684
    %1096 = vmatpush.msra.mxu0 %v682
    %1097 = vmatpush.msra.mxu0 %v680
    %1098 = vmatpush.msra.mxu0 %v678
    %1099 = vmatpush.msra.mxu0 %v676
    %1100 = vmatpush.msra.mxu0 %v674
    %1101 = vmatpush.msra.mxu0 %v672
    %1102 = vmatpush.msra.mxu0 %v670
    %1103 = vmatpush.msra.mxu0 %v668
    %1104 = vmatpush.msra.mxu0 %v666
    %1105 = vmatpush.msra.mxu0 %v664
    %1106 = vmatmul.f32.gmra.mxu0 %v568
    %v1107 = vpop.f32.mrf.mxu0
    %v1108 = vadd.f32 %v1043, %v1107
    %1109 = vmatmul.f32.gmra.mxu0 %v572
    %v1110 = vpop.f32.mrf.mxu0
    %v1111 = vadd.f32 %v1046, %v1110
    %1112 = vmatmul.f32.gmra.mxu0 %v576
    %v1113 = vpop.f32.mrf.mxu0
    %v1114 = vadd.f32 %v1049, %v1113
    %1115 = vmatmul.f32.gmra.mxu0 %v580
    %v1116 = vpop.f32.mrf.mxu0
    %v1117 = vadd.f32 %v1052, %v1116
    %1118 = vmatmul.f32.gmra.mxu0 %v584
    %v1119 = vpop.f32.mrf.mxu0
    %v1120 = vadd.f32 %v1055, %v1119
    %1121 = vmatmul.f32.gmra.mxu0 %v588
    %v1122 = vpop.f32.mrf.mxu0
    %v1123 = vadd.f32 %v1058, %v1122
    %1124 = vmatmul.f32.gmra.mxu0 %v592
    %v1125 = vpop.f32.mrf.mxu0
    %v1126 = vadd.f32 %v1061, %v1125
    %1127 = vmatmul.f32.gmra.mxu0 %v596
    %v1128 = vpop.f32.mrf.mxu0
    %v1129 = vadd.f32 %v1064, %v1128
    %1130 = vmatmul.f32.gmra.mxu0 %v600
    %v1131 = vpop.f32.mrf.mxu0
    %v1132 = vadd.f32 %v1067, %v1131
    %1133 = vmatmul.f32.gmra.mxu0 %v604
    %v1134 = vpop.f32.mrf.mxu0
    %v1135 = vadd.f32 %v1070, %v1134
    %1136 = vmatmul.f32.gmra.mxu0 %v608
    %v1137 = vpop.f32.mrf.mxu0
    %v1138 = vadd.f32 %v1073, %v1137
    %1139 = vmatmul.f32.gmra.mxu0 %v612
    %v1140 = vpop.f32.mrf.mxu0
    %v1141 = vadd.f32 %v1076, %v1140
    %1142 = vmatmul.f32.gmra.mxu0 %v616
    %v1143 = vpop.f32.mrf.mxu0
    %v1144 = vadd.f32 %v1079, %v1143
    %1145 = vmatmul.f32.gmra.mxu0 %v620
    %v1146 = vpop.f32.mrf.mxu0
    %v1147 = vadd.f32 %v1082, %v1146
    %1148 = vmatmul.f32.gmra.mxu0 %v624
    %v1149 = vpop.f32.mrf.mxu0
    %v1150 = vadd.f32 %v1085, %v1149
    %1151 = vmatmul.f32.gmra.mxu0 %v628
    %v1152 = vpop.f32.mrf.mxu0
    %v1153 = vadd.f32 %v1088, %v1152
    %1154 = vdwg.mxu0
    %1155 = vmatpush.msra.mxu0 %v726
    %1156 = vmatpush.msra.mxu0 %v724
    %1157 = vmatpush.msra.mxu0 %v722
    %1158 = vmatpush.msra.mxu0 %v720
    %1159 = vmatpush.msra.mxu0 %v718
    %1160 = vmatpush.msra.mxu0 %v716
    %1161 = vmatpush.msra.mxu0 %v714
    %1162 = vmatpush.msra.mxu0 %v712
    %1163 = vmatpush.msra.mxu0 %v710
    %1164 = vmatpush.msra.mxu0 %v708
    %1165 = vmatpush.msra.mxu0 %v706
    %1166 = vmatpush.msra.mxu0 %v704
    %1167 = vmatpush.msra.mxu0 %v702
    %1168 = vmatpush.msra.mxu0 %v700
    %1169 = vmatpush.msra.mxu0 %v698
    %1170 = vmatpush.msra.mxu0 %v696
    %1171 = vmatmul.f32.gmra.mxu0 %v569
    %v1172 = vpop.f32.mrf.mxu0
    %v1173 = vadd.f32 %v1108, %v1172
    %1174 = vmatmul.f32.gmra.mxu0 %v573
    %v1175 = vpop.f32.mrf.mxu0
    %v1176 = vadd.f32 %v1111, %v1175
    %1177 = vmatmul.f32.gmra.mxu0 %v577
    %v1178 = vpop.f32.mrf.mxu0
    %v1179 = vadd.f32 %v1114, %v1178
    %1180 = vmatmul.f32.gmra.mxu0 %v581
    %v1181 = vpop.f32.mrf.mxu0
    %v1182 = vadd.f32 %v1117, %v1181
    %1183 = vmatmul.f32.gmra.mxu0 %v585
    %v1184 = vpop.f32.mrf.mxu0
    %v1185 = vadd.f32 %v1120, %v1184
    %1186 = vmatmul.f32.gmra.mxu0 %v589
    %v1187 = vpop.f32.mrf.mxu0
    %v1188 = vadd.f32 %v1123, %v1187
    %1189 = vmatmul.f32.gmra.mxu0 %v593
    %v1190 = vpop.f32.mrf.mxu0
    %v1191 = vadd.f32 %v1126, %v1190
    %1192 = vmatmul.f32.gmra.mxu0 %v597
    %v1193 = vpop.f32.mrf.mxu0
    %v1194 = vadd.f32 %v1129, %v1193
    %1195 = vmatmul.f32.gmra.mxu0 %v601
    %v1196 = vpop.f32.mrf.mxu0
    %v1197 = vadd.f32 %v1132, %v1196
    %1198 = vmatmul.f32.gmra.mxu0 %v605
    %v1199 = vpop.f32.mrf.mxu0
    %v1200 = vadd.f32 %v1135, %v1199
    %1201 = vmatmul.f32.gmra.mxu0 %v609
    %v1202 = vpop.f32.mrf.mxu0
    %v1203 = vadd.f32 %v1138, %v1202
    %1204 = vmatmul.f32.gmra.mxu0 %v613
    %v1205 = vpop.f32.mrf.mxu0
    %v1206 = vadd.f32 %v1141, %v1205
    %1207 = vmatmul.f32.gmra.mxu0 %v617
    %v1208 = vpop.f32.mrf.mxu0
    %v1209 = vadd.f32 %v1144, %v1208
    %1210 = vmatmul.f32.gmra.mxu0 %v621
    %v1211 = vpop.f32.mrf.mxu0
    %v1212 = vadd.f32 %v1147, %v1211
    %1213 = vmatmul.f32.gmra.mxu0 %v625
    %v1214 = vpop.f32.mrf.mxu0
    %v1215 = vadd.f32 %v1150, %v1214
    %1216 = vmatmul.f32.gmra.mxu0 %v629
    %v1217 = vpop.f32.mrf.mxu0
    %v1218 = vadd.f32 %v1153, %v1217
    %1219 = vdwg.mxu0
    %1220 = vmatpush.msra.mxu0 %v758
    %1221 = vmatpush.msra.mxu0 %v756
    %1222 = vmatpush.msra.mxu0 %v754
    %1223 = vmatpush.msra.mxu0 %v752
    %1224 = vmatpush.msra.mxu0 %v750
    %1225 = vmatpush.msra.mxu0 %v748
    %1226 = vmatpush.msra.mxu0 %v746
    %1227 = vmatpush.msra.mxu0 %v744
    %1228 = vmatpush.msra.mxu0 %v742
    %1229 = vmatpush.msra.mxu0 %v740
    %1230 = vmatpush.msra.mxu0 %v738
    %1231 = vmatpush.msra.mxu0 %v736
    %1232 = vmatpush.msra.mxu0 %v734
    %1233 = vmatpush.msra.mxu0 %v732
    %1234 = vmatpush.msra.mxu0 %v730
    %1235 = vmatpush.msra.mxu0 %v728
    %1236 = vmatmul.f32.gmra.mxu0 %v570
    %v1237 = vpop.f32.mrf.mxu0
    %v1238 = vadd.f32 %v1173, %v1237
    %1239 = vmatmul.f32.gmra.mxu0 %v574
    %v1240 = vpop.f32.mrf.mxu0
    %v1241 = vadd.f32 %v1176, %v1240
    %1242 = vmatmul.f32.gmra.mxu0 %v578
    %v1243 = vpop.f32.mrf.mxu0
    %v1244 = vadd.f32 %v1179, %v1243
    %1245 = vmatmul.f32.gmra.mxu0 %v582
    %v1246 = vpop.f32.mrf.mxu0
    %v1247 = vadd.f32 %v1182, %v1246
    %1248 = vmatmul.f32.gmra.mxu0 %v586
    %v1249 = vpop.f32.mrf.mxu0
    %v1250 = vadd.f32 %v1185, %v1249
    %1251 = vmatmul.f32.gmra.mxu0 %v590
    %v1252 = vpop.f32.mrf.mxu0
    %v1253 = vadd.f32 %v1188, %v1252
    %1254 = vmatmul.f32.gmra.mxu0 %v594
    %v1255 = vpop.f32.mrf.mxu0
    %v1256 = vadd.f32 %v1191, %v1255
    %1257 = vmatmul.f32.gmra.mxu0 %v598
    %v1258 = vpop.f32.mrf.mxu0
    %v1259 = vadd.f32 %v1194, %v1258
    %1260 = vmatmul.f32.gmra.mxu0 %v602
    %v1261 = vpop.f32.mrf.mxu0
    %v1262 = vadd.f32 %v1197, %v1261
    %1263 = vmatmul.f32.gmra.mxu0 %v606
    %v1264 = vpop.f32.mrf.mxu0
    %v1265 = vadd.f32 %v1200, %v1264
    %1266 = vmatmul.f32.gmra.mxu0 %v610
    %v1267 = vpop.f32.mrf.mxu0
    %v1268 = vadd.f32 %v1203, %v1267
    %1269 = vmatmul.f32.gmra.mxu0 %v614
    %v1270 = vpop.f32.mrf.mxu0
    %v1271 = vadd.f32 %v1206, %v1270
    %1272 = vmatmul.f32.gmra.mxu0 %v618
    %v1273 = vpop.f32.mrf.mxu0
    %v1274 = vadd.f32 %v1209, %v1273
    %1275 = vmatmul.f32.gmra.mxu0 %v622
    %v1276 = vpop.f32.mrf.mxu0
    %v1277 = vadd.f32 %v1212, %v1276
    %1278 = vmatmul.f32.gmra.mxu0 %v626
    %v1279 = vpop.f32.mrf.mxu0
    %v1280 = vadd.f32 %v1215, %v1279
    %1281 = vmatmul.f32.gmra.mxu0 %v630
    %v1282 = vpop.f32.mrf.mxu0
    %v1283 = vadd.f32 %v1218, %v1282
    %1284 = vdwg.mxu0
    %v1285 = vmax.f32 %v978, 0.0
    %v1286 = vmax.f32 %v1238, 0.0
    %v1287 = vmax.f32 %v981, 0.0
    %v1288 = vmax.f32 %v1241, 0.0
    %v1289 = vmax.f32 %v984, 0.0
    %v1290 = vmax.f32 %v1244, 0.0
    %v1291 = vmax.f32 %v987, 0.0
    %v1292 = vmax.f32 %v1247, 0.0
    %v1293 = vmax.f32 %v990, 0.0
    %v1294 = vmax.f32 %v1250, 0.0
    %v1295 = vmax.f32 %v993, 0.0
    %v1296 = vmax.f32 %v1253, 0.0
    %v1297 = vmax.f32 %v996, 0.0
    %v1298 = vmax.f32 %v1256, 0.0
    %v1299 = vmax.f32 %v999, 0.0
    %v1300 = vmax.f32 %v1259, 0.0
    %v1301 = vmax.f32 %v1002, 0.0
    %v1302 = vmax.f32 %v1262, 0.0
    %v1303 = vmax.f32 %v1005, 0.0
    %v1304 = vmax.f32 %v1265, 0.0
    %v1305 = vmax.f32 %v1008, 0.0
    %v1306 = vmax.f32 %v1268, 0.0
    %v1307 = vmax.f32 %v1011, 0.0
    %v1308 = vmax.f32 %v1271, 0.0
    %v1309 = vmax.f32 %v1014, 0.0
    %v1310 = vmax.f32 %v1274, 0.0
    %v1311 = vmax.f32 %v1017, 0.0
    %v1312 = vmax.f32 %v1277, 0.0
    %v1313 = vmax.f32 %v1020, 0.0
    %v1314 = vmax.f32 %v1280, 0.0
    %v1315 = vmax.f32 %v1023, 0.0
    %v1316 = vmax.f32 %v1283, 0.0
    %v1317 = vld [vmem:[#allocation11] sm:$0xff]
    %v1318 = vld [vmem:[#allocation11 + $0x8] sm:$0xff]
    %v1319 = vld [vmem:[#allocation11 + $0x10] sm:$0xff]
    %v1320 = vld [vmem:[#allocation11 + $0x18] sm:$0xff]
    %v1321 = vld [vmem:[#allocation11 + $0x20] sm:$0xff]
    %v1322 = vld [vmem:[#allocation11 + $0x28] sm:$0xff]
    %v1323 = vld [vmem:[#allocation11 + $0x30] sm:$0xff]
    %v1324 = vld [vmem:[#allocation11 + $0x38] sm:$0xff]
    %v1325 = vld [vmem:[#allocation11 + $0x40] sm:$0xff]
    %v1326 = vld [vmem:[#allocation11 + $0x48] sm:$0xff]
    %v1327 = vld [vmem:[#allocation11 + $0x50] sm:$0xff]
    %v1328 = vld [vmem:[#allocation11 + $0x58] sm:$0xff]
    %v1329 = vld [vmem:[#allocation11 + $0x60] sm:$0xff]
    %v1330 = vld [vmem:[#allocation11 + $0x68] sm:$0xff]
    %v1331 = vld [vmem:[#allocation11 + $0x70] sm:$0xff]
    %v1332 = vld [vmem:[#allocation11 + $0x78] sm:$0xff]
    %v1333 = vld [vmem:[#allocation11 + $0x80] sm:$0xff]
    %v1334 = vld [vmem:[#allocation11 + $0x88] sm:$0xff]
    %v1335 = vld [vmem:[#allocation11 + $0x90] sm:$0xff]
    %v1336 = vld [vmem:[#allocation11 + $0x98] sm:$0xff]
    %v1337 = vld [vmem:[#allocation11 + $0xa0] sm:$0xff]
    %v1338 = vld [vmem:[#allocation11 + $0xa8] sm:$0xff]
    %v1339 = vld [vmem:[#allocation11 + $0xb0] sm:$0xff]
    %v1340 = vld [vmem:[#allocation11 + $0xb8] sm:$0xff]
    %v1341 = vld [vmem:[#allocation11 + $0xc0] sm:$0xff]
    %v1342 = vld [vmem:[#allocation11 + $0xc8] sm:$0xff]
    %v1343 = vld [vmem:[#allocation11 + $0xd0] sm:$0xff]
    %v1344 = vld [vmem:[#allocation11 + $0xd8] sm:$0xff]
    %v1345 = vld [vmem:[#allocation11 + $0xe0] sm:$0xff]
    %v1346 = vld [vmem:[#allocation11 + $0xe8] sm:$0xff]
    %v1347 = vld [vmem:[#allocation11 + $0xf0] sm:$0xff]
    %v1348 = vld [vmem:[#allocation11 + $0xf8] sm:$0xff]
    %v1349 = vld [vmem:[%s6] sm:$0x1]
    %v1351 = vperm.slane %v1349, 0
    %1353 = vmatpush.msra.mxu0 %v1332
    %1354 = vmatpush.msra.mxu0 %v1331
    %1355 = vmatpush.msra.mxu0 %v1330
    %1356 = vmatpush.msra.mxu0 %v1329
    %1357 = vmatpush.msra.mxu0 %v1328
    %1358 = vmatpush.msra.mxu0 %v1327
    %1359 = vmatpush.msra.mxu0 %v1326
    %1360 = vmatpush.msra.mxu0 %v1325
    %1361 = vmatpush.msra.mxu0 %v1324
    %1362 = vmatpush.msra.mxu0 %v1323
    %1363 = vmatpush.msra.mxu0 %v1322
    %1364 = vmatpush.msra.mxu0 %v1321
    %1365 = vmatpush.msra.mxu0 %v1320
    %1366 = vmatpush.msra.mxu0 %v1319
    %1367 = vmatpush.msra.mxu0 %v1318
    %1368 = vmatpush.msra.mxu0 %v1317
    %1369 = vmatmul.f32.gmra.mxu0 %v1285
    %v1370 = vpop.f32.mrf.mxu0
    %v1371 = vadd.f32 %v1351, %v1370
    %1372 = vmatmul.f32.gmra.mxu0 %v1287
    %v1373 = vpop.f32.mrf.mxu0
    %v1374 = vadd.f32 %v1351, %v1373
    %1375 = vmatmul.f32.gmra.mxu0 %v1289
    %v1376 = vpop.f32.mrf.mxu0
    %v1377 = vadd.f32 %v1351, %v1376
    %1378 = vmatmul.f32.gmra.mxu0 %v1291
    %v1379 = vpop.f32.mrf.mxu0
    %v1380 = vadd.f32 %v1351, %v1379
    %1381 = vmatmul.f32.gmra.mxu0 %v1293
    %v1382 = vpop.f32.mrf.mxu0
    %v1383 = vadd.f32 %v1351, %v1382
    %1384 = vmatmul.f32.gmra.mxu0 %v1295
    %v1385 = vpop.f32.mrf.mxu0
    %v1386 = vadd.f32 %v1351, %v1385
    %1387 = vmatmul.f32.gmra.mxu0 %v1297
    %v1388 = vpop.f32.mrf.mxu0
    %v1389 = vadd.f32 %v1351, %v1388
    %1390 = vmatmul.f32.gmra.mxu0 %v1299
    %v1391 = vpop.f32.mrf.mxu0
    %v1392 = vadd.f32 %v1351, %v1391
    %1393 = vmatmul.f32.gmra.mxu0 %v1301
    %v1394 = vpop.f32.mrf.mxu0
    %v1395 = vadd.f32 %v1351, %v1394
    %1396 = vmatmul.f32.gmra.mxu0 %v1303
    %v1397 = vpop.f32.mrf.mxu0
    %v1398 = vadd.f32 %v1351, %v1397
    %1399 = vmatmul.f32.gmra.mxu0 %v1305
    %v1400 = vpop.f32.mrf.mxu0
    %v1401 = vadd.f32 %v1351, %v1400
    %1402 = vmatmul.f32.gmra.mxu0 %v1307
    %v1403 = vpop.f32.mrf.mxu0
    %v1404 = vadd.f32 %v1351, %v1403
    %1405 = vmatmul.f32.gmra.mxu0 %v1309
    %v1406 = vpop.f32.mrf.mxu0
    %v1407 = vadd.f32 %v1351, %v1406
    %1408 = vmatmul.f32.gmra.mxu0 %v1311
    %v1409 = vpop.f32.mrf.mxu0
    %v1410 = vadd.f32 %v1351, %v1409
    %1411 = vmatmul.f32.gmra.mxu0 %v1313
    %v1412 = vpop.f32.mrf.mxu0
    %v1413 = vadd.f32 %v1351, %v1412
    %1414 = vmatmul.f32.gmra.mxu0 %v1315
    %v1415 = vpop.f32.mrf.mxu0
    %v1416 = vadd.f32 %v1351, %v1415
    %1417 = vdwg.mxu0
    %1418 = vmatpush.msra.mxu0 %v1348
    %1419 = vmatpush.msra.mxu0 %v1347
    %1420 = vmatpush.msra.mxu0 %v1346
    %1421 = vmatpush.msra.mxu0 %v1345
    %1422 = vmatpush.msra.mxu0 %v1344
    %1423 = vmatpush.msra.mxu0 %v1343
    %1424 = vmatpush.msra.mxu0 %v1342
    %1425 = vmatpush.msra.mxu0 %v1341
    %1426 = vmatpush.msra.mxu0 %v1340
    %1427 = vmatpush.msra.mxu0 %v1339
    %1428 = vmatpush.msra.mxu0 %v1338
    %1429 = vmatpush.msra.mxu0 %v1337
    %1430 = vmatpush.msra.mxu0 %v1336
    %1431 = vmatpush.msra.mxu0 %v1335
    %1432 = vmatpush.msra.mxu0 %v1334
    %1433 = vmatpush.msra.mxu0 %v1333
    %1434 = vmatmul.f32.gmra.mxu0 %v1286
    %v1435 = vpop.f32.mrf.mxu0
    %v1436 = vadd.f32 %v1371, %v1435
    %1437 = vmatmul.f32.gmra.mxu0 %v1288
    %v1438 = vpop.f32.mrf.mxu0
    %v1439 = vadd.f32 %v1374, %v1438
    %1440 = vmatmul.f32.gmra.mxu0 %v1290
    %v1441 = vpop.f32.mrf.mxu0
    %v1442 = vadd.f32 %v1377, %v1441
    %1443 = vmatmul.f32.gmra.mxu0 %v1292
    %v1444 = vpop.f32.mrf.mxu0
    %v1445 = vadd.f32 %v1380, %v1444
    %1446 = vmatmul.f32.gmra.mxu0 %v1294
    %v1447 = vpop.f32.mrf.mxu0
    %v1448 = vadd.f32 %v1383, %v1447
    %1449 = vmatmul.f32.gmra.mxu0 %v1296
    %v1450 = vpop.f32.mrf.mxu0
    %v1451 = vadd.f32 %v1386, %v1450
    %1452 = vmatmul.f32.gmra.mxu0 %v1298
    %v1453 = vpop.f32.mrf.mxu0
    %v1454 = vadd.f32 %v1389, %v1453
    %1455 = vmatmul.f32.gmra.mxu0 %v1300
    %v1456 = vpop.f32.mrf.mxu0
    %v1457 = vadd.f32 %v1392, %v1456
    %1458 = vmatmul.f32.gmra.mxu0 %v1302
    %v1459 = vpop.f32.mrf.mxu0
    %v1460 = vadd.f32 %v1395, %v1459
    %1461 = vmatmul.f32.gmra.mxu0 %v1304
    %v1462 = vpop.f32.mrf.mxu0
    %v1463 = vadd.f32 %v1398, %v1462
    %1464 = vmatmul.f32.gmra.mxu0 %v1306
    %v1465 = vpop.f32.mrf.mxu0
    %v1466 = vadd.f32 %v1401, %v1465
    %1467 = vmatmul.f32.gmra.mxu0 %v1308
    %v1468 = vpop.f32.mrf.mxu0
    %v1469 = vadd.f32 %v1404, %v1468
    %1470 = vmatmul.f32.gmra.mxu0 %v1310
    %v1471 = vpop.f32.mrf.mxu0
    %v1472 = vadd.f32 %v1407, %v1471
    %1473 = vmatmul.f32.gmra.mxu0 %v1312
    %v1474 = vpop.f32.mrf.mxu0
    %v1475 = vadd.f32 %v1410, %v1474
    %1476 = vmatmul.f32.gmra.mxu0 %v1314
    %v1477 = vpop.f32.mrf.mxu0
    %v1478 = vadd.f32 %v1413, %v1477
    %1479 = vmatmul.f32.gmra.mxu0 %v1316
    %v1480 = vpop.f32.mrf.mxu0
    %v1481 = vadd.f32 %v1416, %v1480
    %1482 = vdwg.mxu0
    %v1483 = vmax.f32 %v1436, 0.0
    %v1484 = vmax.f32 %v1439, 0.0
    %v1485 = vmax.f32 %v1442, 0.0
    %v1486 = vmax.f32 %v1445, 0.0
    %v1487 = vmax.f32 %v1448, 0.0
    %v1488 = vmax.f32 %v1451, 0.0
    %v1489 = vmax.f32 %v1454, 0.0
    %v1490 = vmax.f32 %v1457, 0.0
    %v1491 = vmax.f32 %v1460, 0.0
    %v1492 = vmax.f32 %v1463, 0.0
    %v1493 = vmax.f32 %v1466, 0.0
    %v1494 = vmax.f32 %v1469, 0.0
    %v1495 = vmax.f32 %v1472, 0.0
    %v1496 = vmax.f32 %v1475, 0.0
    %v1497 = vmax.f32 %v1478, 0.0
    %v1498 = vmax.f32 %v1481, 0.0
    %v1499 = vld [vmem:[#allocation12] sm:$0xff]
    %v1500 = vld [vmem:[#allocation12 + $0x8] sm:$0xff]
    %v1501 = vld [vmem:[#allocation12 + $0x10] sm:$0xff]
    %v1502 = vld [vmem:[#allocation12 + $0x18] sm:$0xff]
    %v1503 = vld [vmem:[#allocation12 + $0x20] sm:$0xff]
    %v1504 = vld [vmem:[#allocation12 + $0x28] sm:$0xff]
    %v1505 = vld [vmem:[#allocation12 + $0x30] sm:$0xff]
    %v1506 = vld [vmem:[#allocation12 + $0x38] sm:$0xff]
    %v1507 = vld [vmem:[#allocation12 + $0x40] sm:$0xff]
    %v1508 = vld [vmem:[#allocation12 + $0x48] sm:$0xff]
    %v1509 = vld [vmem:[#allocation12 + $0x50] sm:$0xff]
    %v1510 = vld [vmem:[#allocation12 + $0x58] sm:$0xff]
    %v1511 = vld [vmem:[#allocation12 + $0x60] sm:$0xff]
    %v1512 = vld [vmem:[#allocation12 + $0x68] sm:$0xff]
    %v1513 = vld [vmem:[#allocation12 + $0x70] sm:$0xff]
    %v1514 = vld [vmem:[#allocation12 + $0x78] sm:$0xff]
    %v1515 = vld [vmem:[%s8] sm:$0x1]
    %v1517 = vperm.slane %v1515, 0
    %1519 = vmatpush.msra.mxu0 %v1514
    %1520 = vmatpush.msra.mxu0 %v1513
    %1521 = vmatpush.msra.mxu0 %v1512
    %1522 = vmatpush.msra.mxu0 %v1511
    %1523 = vmatpush.msra.mxu0 %v1510
    %1524 = vmatpush.msra.mxu0 %v1509
    %1525 = vmatpush.msra.mxu0 %v1508
    %1526 = vmatpush.msra.mxu0 %v1507
    %1527 = vmatpush.msra.mxu0 %v1506
    %1528 = vmatpush.msra.mxu0 %v1505
    %1529 = vmatpush.msra.mxu0 %v1504
    %1530 = vmatpush.msra.mxu0 %v1503
    %1531 = vmatpush.msra.mxu0 %v1502
    %1532 = vmatpush.msra.mxu0 %v1501
    %1533 = vmatpush.msra.mxu0 %v1500
    %1534 = vmatpush.msra.mxu0 %v1499
    %1535 = vmatmul.f32.gmra.mxu0 %v1483
    %v1536 = vpop.f32.mrf.mxu0
    %v1537 = vadd.f32 %v1517, %v1536
    %1538 = vmatmul.f32.gmra.mxu0 %v1484
    %v1539 = vpop.f32.mrf.mxu0
    %v1540 = vadd.f32 %v1517, %v1539
    %1541 = vmatmul.f32.gmra.mxu0 %v1485
    %v1542 = vpop.f32.mrf.mxu0
    %v1543 = vadd.f32 %v1517, %v1542
    %1544 = vmatmul.f32.gmra.mxu0 %v1486
    %v1545 = vpop.f32.mrf.mxu0
    %v1546 = vadd.f32 %v1517, %v1545
    %1547 = vmatmul.f32.gmra.mxu0 %v1487
    %v1548 = vpop.f32.mrf.mxu0
    %v1549 = vadd.f32 %v1517, %v1548
    %1550 = vmatmul.f32.gmra.mxu0 %v1488
    %v1551 = vpop.f32.mrf.mxu0
    %v1552 = vadd.f32 %v1517, %v1551
    %1553 = vmatmul.f32.gmra.mxu0 %v1489
    %v1554 = vpop.f32.mrf.mxu0
    %v1555 = vadd.f32 %v1517, %v1554
    %1556 = vmatmul.f32.gmra.mxu0 %v1490
    %v1557 = vpop.f32.mrf.mxu0
    %v1558 = vadd.f32 %v1517, %v1557
    %1559 = vmatmul.f32.gmra.mxu0 %v1491
    %v1560 = vpop.f32.mrf.mxu0
    %v1561 = vadd.f32 %v1517, %v1560
    %1562 = vmatmul.f32.gmra.mxu0 %v1492
    %v1563 = vpop.f32.mrf.mxu0
    %v1564 = vadd.f32 %v1517, %v1563
    %1565 = vmatmul.f32.gmra.mxu0 %v1493
    %v1566 = vpop.f32.mrf.mxu0
    %v1567 = vadd.f32 %v1517, %v1566
    %1568 = vmatmul.f32.gmra.mxu0 %v1494
    %v1569 = vpop.f32.mrf.mxu0
    %v1570 = vadd.f32 %v1517, %v1569
    %1571 = vmatmul.f32.gmra.mxu0 %v1495
    %v1572 = vpop.f32.mrf.mxu0
    %v1573 = vadd.f32 %v1517, %v1572
    %1574 = vmatmul.f32.gmra.mxu0 %v1496
    %v1575 = vpop.f32.mrf.mxu0
    %v1576 = vadd.f32 %v1517, %v1575
    %1577 = vmatmul.f32.gmra.mxu0 %v1497
    %v1578 = vpop.f32.mrf.mxu0
    %v1579 = vadd.f32 %v1517, %v1578
    %1580 = vmatmul.f32.gmra.mxu0 %v1498
    %v1581 = vpop.f32.mrf.mxu0
    %v1582 = vadd.f32 %v1517, %v1581
    %1583 = vdwg.mxu0
    %v1584 = vmax.f32 %v1537, 0.0
    %v1585 = vmax.f32 %v1540, 0.0
    %v1586 = vmax.f32 %v1543, 0.0
    %v1587 = vmax.f32 %v1546, 0.0
    %v1588 = vmax.f32 %v1549, 0.0
    %v1589 = vmax.f32 %v1552, 0.0
    %v1590 = vmax.f32 %v1555, 0.0
    %v1591 = vmax.f32 %v1558, 0.0
    %v1592 = vmax.f32 %v1561, 0.0
    %v1593 = vmax.f32 %v1564, 0.0
    %v1594 = vmax.f32 %v1567, 0.0
    %v1595 = vmax.f32 %v1570, 0.0
    %v1596 = vmax.f32 %v1573, 0.0
    %v1597 = vmax.f32 %v1576, 0.0
    %v1598 = vmax.f32 %v1579, 0.0
    %v1599 = vmax.f32 %v1582, 0.0
    %v1600 = vld [vmem:[#allocation14] sm:$0xff]
    %v1601 = vld [vmem:[#allocation14 + $0x8] sm:$0xff]
    %v1602 = vld [vmem:[#allocation14 + $0x10] sm:$0xff]
    %v1603 = vld [vmem:[#allocation14 + $0x18] sm:$0xff]
    %v1604 = vld [vmem:[#allocation14 + $0x20] sm:$0xff]
    %v1605 = vld [vmem:[#allocation14 + $0x28] sm:$0xff]
    %v1606 = vld [vmem:[#allocation14 + $0x30] sm:$0xff]
    %v1607 = vld [vmem:[#allocation14 + $0x38] sm:$0xff]
    %v1608 = vld [vmem:[#allocation14 + $0x40] sm:$0xff]
    %v1609 = vld [vmem:[#allocation14 + $0x48] sm:$0xff]
    %v1610 = vld [vmem:[#allocation14 + $0x50] sm:$0xff]
    %v1611 = vld [vmem:[#allocation14 + $0x58] sm:$0xff]
    %v1612 = vld [vmem:[#allocation14 + $0x60] sm:$0xff]
    %v1613 = vld [vmem:[#allocation14 + $0x68] sm:$0xff]
    %v1614 = vld [vmem:[#allocation14 + $0x70] sm:$0xff]
    %v1615 = vld [vmem:[#allocation14 + $0x78] sm:$0xff]
    %v1616 = vld [vmem:[%s10] sm:$0x1]
    %v1618 = vperm.slane %v1616, 0
    %1620 = vmatpush.msra.mxu0 %v1615
    %1621 = vmatpush.msra.mxu0 %v1614
    %1622 = vmatpush.msra.mxu0 %v1613
    %1623 = vmatpush.msra.mxu0 %v1612
    %1624 = vmatpush.msra.mxu0 %v1611
    %1625 = vmatpush.msra.mxu0 %v1610
    %1626 = vmatpush.msra.mxu0 %v1609
    %1627 = vmatpush.msra.mxu0 %v1608
    %1628 = vmatpush.msra.mxu0 %v1607
    %1629 = vmatpush.msra.mxu0 %v1606
    %1630 = vmatpush.msra.mxu0 %v1605
    %1631 = vmatpush.msra.mxu0 %v1604
    %1632 = vmatpush.msra.mxu0 %v1603
    %1633 = vmatpush.msra.mxu0 %v1602
    %1634 = vmatpush.msra.mxu0 %v1601
    %1635 = vmatpush.msra.mxu0 %v1600
    %1636 = vmatmul.f32.gmra.mxu0 %v1584
    %v1637 = vpop.f32.mrf.mxu0
    %v1638 = vadd.f32 %v1618, %v1637
    %1639 = vmatmul.f32.gmra.mxu0 %v1585
    %v1640 = vpop.f32.mrf.mxu0
    %v1641 = vadd.f32 %v1618, %v1640
    %1642 = vmatmul.f32.gmra.mxu0 %v1586
    %v1643 = vpop.f32.mrf.mxu0
    %v1644 = vadd.f32 %v1618, %v1643
    %1645 = vmatmul.f32.gmra.mxu0 %v1587
    %v1646 = vpop.f32.mrf.mxu0
    %v1647 = vadd.f32 %v1618, %v1646
    %1648 = vmatmul.f32.gmra.mxu0 %v1588
    %v1649 = vpop.f32.mrf.mxu0
    %v1650 = vadd.f32 %v1618, %v1649
    %1651 = vmatmul.f32.gmra.mxu0 %v1589
    %v1652 = vpop.f32.mrf.mxu0
    %v1653 = vadd.f32 %v1618, %v1652
    %1654 = vmatmul.f32.gmra.mxu0 %v1590
    %v1655 = vpop.f32.mrf.mxu0
    %v1656 = vadd.f32 %v1618, %v1655
    %1657 = vmatmul.f32.gmra.mxu0 %v1591
    %v1658 = vpop.f32.mrf.mxu0
    %v1659 = vadd.f32 %v1618, %v1658
    %1660 = vmatmul.f32.gmra.mxu0 %v1592
    %v1661 = vpop.f32.mrf.mxu0
    %v1662 = vadd.f32 %v1618, %v1661
    %1663 = vmatmul.f32.gmra.mxu0 %v1593
    %v1664 = vpop.f32.mrf.mxu0
    %v1665 = vadd.f32 %v1618, %v1664
    %1666 = vmatmul.f32.gmra.mxu0 %v1594
    %v1667 = vpop.f32.mrf.mxu0
    %v1668 = vadd.f32 %v1618, %v1667
    %1669 = vmatmul.f32.gmra.mxu0 %v1595
    %v1670 = vpop.f32.mrf.mxu0
    %v1671 = vadd.f32 %v1618, %v1670
    %1672 = vmatmul.f32.gmra.mxu0 %v1596
    %v1673 = vpop.f32.mrf.mxu0
    %v1674 = vadd.f32 %v1618, %v1673
    %1675 = vmatmul.f32.gmra.mxu0 %v1597
    %v1676 = vpop.f32.mrf.mxu0
    %v1677 = vadd.f32 %v1618, %v1676
    %1678 = vmatmul.f32.gmra.mxu0 %v1598
    %v1679 = vpop.f32.mrf.mxu0
    %v1680 = vadd.f32 %v1618, %v1679
    %1681 = vmatmul.f32.gmra.mxu0 %v1599
    %v1682 = vpop.f32.mrf.mxu0
    %v1683 = vadd.f32 %v1618, %v1682
    %1684 = vdwg.mxu0
    %v1685 = vmax.f32 %v1638, 0.0
    %v1686 = vmax.f32 %v1641, 0.0
    %v1687 = vmax.f32 %v1644, 0.0
    %v1688 = vmax.f32 %v1647, 0.0
    %v1689 = vmax.f32 %v1650, 0.0
    %v1690 = vmax.f32 %v1653, 0.0
    %v1691 = vmax.f32 %v1656, 0.0
    %v1692 = vmax.f32 %v1659, 0.0
    %v1693 = vmax.f32 %v1662, 0.0
    %v1694 = vmax.f32 %v1665, 0.0
    %v1695 = vmax.f32 %v1668, 0.0
    %v1696 = vmax.f32 %v1671, 0.0
    %v1697 = vmax.f32 %v1674, 0.0
    %v1698 = vmax.f32 %v1677, 0.0
    %v1699 = vmax.f32 %v1680, 0.0
    %v1700 = vmax.f32 %v1683, 0.0
    %v1701 = vld [vmem:[#allocation15] sm:$0xff]
    %v1702 = vld [vmem:[#allocation15 + $0x8] sm:$0xff]
    %v1703 = vld [vmem:[#allocation15 + $0x10] sm:$0xff]
    %v1704 = vld [vmem:[#allocation15 + $0x18] sm:$0xff]
    %v1705 = vld [vmem:[#allocation15 + $0x20] sm:$0xff]
    %v1706 = vld [vmem:[#allocation15 + $0x28] sm:$0xff]
    %v1707 = vld [vmem:[#allocation15 + $0x30] sm:$0xff]
    %v1708 = vld [vmem:[#allocation15 + $0x38] sm:$0xff]
    %v1709 = vld [vmem:[#allocation15 + $0x40] sm:$0xff]
    %v1710 = vld [vmem:[#allocation15 + $0x48] sm:$0xff]
    %v1711 = vld [vmem:[#allocation15 + $0x50] sm:$0xff]
    %v1712 = vld [vmem:[#allocation15 + $0x58] sm:$0xff]
    %v1713 = vld [vmem:[#allocation15 + $0x60] sm:$0xff]
    %v1714 = vld [vmem:[#allocation15 + $0x68] sm:$0xff]
    %v1715 = vld [vmem:[#allocation15 + $0x70] sm:$0xff]
    %v1716 = vld [vmem:[#allocation15 + $0x78] sm:$0xff]
    %v1717 = vld [vmem:[%s12] sm:$0x1]
    %v1719 = vperm.slane %v1717, 0
    %1721 = vmatpush.msra.mxu0 %v1716
    %1722 = vmatpush.msra.mxu0 %v1715
    %1723 = vmatpush.msra.mxu0 %v1714
    %1724 = vmatpush.msra.mxu0 %v1713
    %1725 = vmatpush.msra.mxu0 %v1712
    %1726 = vmatpush.msra.mxu0 %v1711
    %1727 = vmatpush.msra.mxu0 %v1710
    %1728 = vmatpush.msra.mxu0 %v1709
    %1729 = vmatpush.msra.mxu0 %v1708
    %1730 = vmatpush.msra.mxu0 %v1707
    %1731 = vmatpush.msra.mxu0 %v1706
    %1732 = vmatpush.msra.mxu0 %v1705
    %1733 = vmatpush.msra.mxu0 %v1704
    %1734 = vmatpush.msra.mxu0 %v1703
    %1735 = vmatpush.msra.mxu0 %v1702
    %1736 = vmatpush.msra.mxu0 %v1701
    %1737 = vmatmul.f32.gmra.mxu0 %v1685
    %v1738 = vpop.f32.mrf.mxu0
    %v1739 = vadd.f32 %v1719, %v1738
    %1740 = vmatmul.f32.gmra.mxu0 %v1686
    %v1741 = vpop.f32.mrf.mxu0
    %v1742 = vadd.f32 %v1719, %v1741
    %1743 = vmatmul.f32.gmra.mxu0 %v1687
    %v1744 = vpop.f32.mrf.mxu0
    %v1745 = vadd.f32 %v1719, %v1744
    %1746 = vmatmul.f32.gmra.mxu0 %v1688
    %v1747 = vpop.f32.mrf.mxu0
    %v1748 = vadd.f32 %v1719, %v1747
    %1749 = vmatmul.f32.gmra.mxu0 %v1689
    %v1750 = vpop.f32.mrf.mxu0
    %v1751 = vadd.f32 %v1719, %v1750
    %1752 = vmatmul.f32.gmra.mxu0 %v1690
    %v1753 = vpop.f32.mrf.mxu0
    %v1754 = vadd.f32 %v1719, %v1753
    %1755 = vmatmul.f32.gmra.mxu0 %v1691
    %v1756 = vpop.f32.mrf.mxu0
    %v1757 = vadd.f32 %v1719, %v1756
    %1758 = vmatmul.f32.gmra.mxu0 %v1692
    %v1759 = vpop.f32.mrf.mxu0
    %v1760 = vadd.f32 %v1719, %v1759
    %1761 = vmatmul.f32.gmra.mxu0 %v1693
    %v1762 = vpop.f32.mrf.mxu0
    %v1763 = vadd.f32 %v1719, %v1762
    %1764 = vmatmul.f32.gmra.mxu0 %v1694
    %v1765 = vpop.f32.mrf.mxu0
    %v1766 = vadd.f32 %v1719, %v1765
    %1767 = vmatmul.f32.gmra.mxu0 %v1695
    %v1768 = vpop.f32.mrf.mxu0
    %v1769 = vadd.f32 %v1719, %v1768
    %1770 = vmatmul.f32.gmra.mxu0 %v1696
    %v1771 = vpop.f32.mrf.mxu0
    %v1772 = vadd.f32 %v1719, %v1771
    %1773 = vmatmul.f32.gmra.mxu0 %v1697
    %v1774 = vpop.f32.mrf.mxu0
    %v1775 = vadd.f32 %v1719, %v1774
    %1776 = vmatmul.f32.gmra.mxu0 %v1698
    %v1777 = vpop.f32.mrf.mxu0
    %v1778 = vadd.f32 %v1719, %v1777
    %1779 = vmatmul.f32.gmra.mxu0 %v1699
    %v1780 = vpop.f32.mrf.mxu0
    %v1781 = vadd.f32 %v1719, %v1780
    %1782 = vmatmul.f32.gmra.mxu0 %v1700
    %v1783 = vpop.f32.mrf.mxu0
    %v1784 = vadd.f32 %v1719, %v1783
    %1785 = vdwg.mxu0
    %1786 = vxpose.xlu0.b32.start [1/16] %v1739, 128
    %1787 = vxpose.xlu0.b32.cont [2/16] %v1742, 128
    %1788 = vxpose.xlu0.b32.cont [3/16] %v1745, 128
    %1789 = vxpose.xlu0.b32.cont [4/16] %v1748, 128
    %1790 = vxpose.xlu0.b32.cont [5/16] %v1751, 128
    %1791 = vxpose.xlu0.b32.cont [6/16] %v1754, 128
    %1792 = vxpose.xlu0.b32.cont [7/16] %v1757, 128
    %1793 = vxpose.xlu0.b32.cont [8/16] %v1760, 128
    %1794 = vxpose.xlu0.b32.cont [9/16] %v1763, 128
    %1795 = vxpose.xlu0.b32.cont [10/16] %v1766, 128
    %1796 = vxpose.xlu0.b32.cont [11/16] %v1769, 128
    %1797 = vxpose.xlu0.b32.cont [12/16] %v1772, 128
    %1798 = vxpose.xlu0.b32.cont [13/16] %v1775, 128
    %1799 = vxpose.xlu0.b32.cont [14/16] %v1778, 128
    %1800 = vxpose.xlu0.b32.cont [15/16] %v1781, 128
    %1801 = vxpose.xlu0.b32.end [16/16] %v1784, 128
    %v1802 = vpop.trf.xlu0
    %v1803 = vpop.trf.xlu0
    %v1804 = vpop.trf.xlu0
    %v1805 = vpop.trf.xlu0
    %v1806 = vpop.trf.xlu0
    %v1807 = vpop.trf.xlu0
    %v1808 = vpop.trf.xlu0
    %v1809 = vpop.trf.xlu0
    %v1810 = vpop.trf.xlu0
    %v1811 = vpop.trf.xlu0
    %v1812 = vpop.trf.xlu0
    %v1813 = vpop.trf.xlu0
    %v1814 = vpop.trf.xlu0
    %v1815 = vpop.trf.xlu0
    %v1816 = vpop.trf.xlu0
    %v1817 = vpop.trf.xlu0
    %1818 = vst [vmem:[#allocation17] sm:$0x1] %v1802
    // Predicated region
    $region86: #{tpu_custom_call.1} parent=1 // pred_check
      _
    $region87: #{tpu_custom_call.1} parent=1 // pred_check_branch
      %1820 = sbr.rel (0) target = $region89
    $region88: #{tpu_custom_call.1} parent=1 // pred_region
      %1822 = vsyncadd [#allocation5], 0
      %s1824 = sshll.u32 [#allocation17], 4
      %s1825 = int_to_ptr.vmem [resolvable:$true] %s1824
      %s1826 = sshll.u32 %s13, 4
      %s1827 = int_to_ptr.hbm [resolvable:$true] %s1826
      %1829 = dma.vmem_to_hbm [thread:$0]  %s1825, 16, %s1827, [#allocation5]
    $region89: #{tpu_custom_call.1} parent=1 // pred_fallthru
      _
    // Predicated region
    $region90: #{tpu_custom_call.1} parent=1 // pred_check
      _
    $region91: #{tpu_custom_call.1} parent=1 // pred_check_branch
      %1831 = sbr.rel (0) target = $region93
    $region92: #{tpu_custom_call.1} parent=1 // pred_region
      %1833 = dma.done [#allocation5], 16
    $region93: #{tpu_custom_call.1} parent=1 // pred_fallthru
      _
    %1834 = vsyncpa [#allocation4], 1
    %1835 = vsyncpa [#allocation7], 1
    %1836 = vsyncpa [#allocation10], 1
    %1837 = vsyncpa [#allocation13], 1
    %1838 = vsyncpa [#allocation16], 1
    %1839 = vsyncpa [#allocation5], 1

</llo_original>
